<compile_context>
chip_gen: v7x
topology: tpu7x:2x2x1
jax: 0.10.0
libtpu: 0.0.40
codegen_flags: <defaults>
</compile_context>

<pallas_src>
import numpy as np

import jax
import jax.numpy as jnp
from jax import lax
from jax.experimental import pallas as pl
from jax.experimental.pallas import tpu as pltpu


# ----------------------------------------------------------------------------
# Constant bilinear (align_corners=False, scale=2) interpolation matrices.
# ----------------------------------------------------------------------------
def _row_interp_matrix(th):
    # Maps TH+2 input rows [clamped r0-1, r0 .. r0+TH-1, clamped r0+TH] to 2*TH output rows.
    r = np.zeros((2 * th, th + 2), np.float32)
    for i in range(th):
        r[2 * i, i + 1] += 0.75
        r[2 * i, i] += 0.25          # column 0 is the (clamped) top halo row
        r[2 * i + 1, i + 1] += 0.75
        r[2 * i + 1, i + 2] += 0.25  # column TH+1 is the (clamped) bottom halo row
    return jnp.asarray(r)


def _col_interp_matrix(w):
    # Maps W input columns to 2*W interleaved output columns (border-clamped).
    s = np.zeros((w, 2 * w), np.float32)
    for j in range(w):
        s[j, 2 * j] += 0.75
        s[max(j - 1, 0), 2 * j] += 0.25
        s[j, 2 * j + 1] += 0.75
        s[min(j + 1, w - 1), 2 * j + 1] += 0.25
    return jnp.asarray(s)


def _pick_tile_rows(h, w, cout, override=None):
    """Largest row-tile that keeps the (double-buffered) output block within a VMEM budget."""
    if override is not None:
        th = int(override)
        if h % th != 0 or not (th % 8 == 0 or th == h):
            raise ValueError(f"invalid tile_rows={th} for H={h}")
        return th
    # output block = Cout * 2*TH * 2*W * 4 bytes; keep each buffer around <= 4 MiB
    cap = max(8, (4 * 1024 * 1024) // (16 * cout * w))
    if h <= cap:
        return h
    cap = (cap // 8) * 8
    for t in range(cap, 7, -8):
        if h % t == 0:
            return t
    return h  # fallback: no 8-aligned divisor of H; process all rows in one tile


# ----------------------------------------------------------------------------
# Kernel: per (batch, row-tile) -> 1x1 conv (+folded BN) + LeakyReLU(0.1) and
# bilinear 2x upsample via two constant-matrix matmuls, written directly as the
# interleaved NCHW output tile.
# ----------------------------------------------------------------------------
def _router_kernel(x1_ref, top_ref, bot_ref, r_ref, s_ref, w_ref, b_ref,
                   base_ref, out_ref):
    # x1_ref  : (1, Cin, TH, W)      rows [r0, r0+TH) of x1
    # top_ref : (1, 1, Cin, W)       clamped row r0-1
    # bot_ref : (1, 1, Cin, W)       clamped row r0+TH
    # r_ref   : (2*TH, TH+2)         row-interp matrix (f32)
    # s_ref   : (W, 2*W)             col-interp matrix (f32)
    # w_ref   : (Cout, Cin)          conv weight with BN scale folded in
    # b_ref   : (Cout, 1)            folded BN bias
    # base_ref: aliased final output buffer (holds padded x2); only out_ref writes it here
    # out_ref : (1, Cout, 2*TH, 2*W) upsampled conv branch, channels [0, Cout) of the output
    del base_ref

    cin = x1_ref.shape[1]
    cout = out_ref.shape[1]

    x_main = x1_ref[0]        # (Cin, TH, W)
    x_top = top_ref[0, 0]     # (Cin, W)
    x_bot = bot_ref[0, 0]     # (Cin, W)
    R = r_ref[...]
    S = s_ref[...]
    wv = w_ref[...]           # (Cout, Cin)
    bv = b_ref[...]           # (Cout, 1)

    # Per input channel: TH+2 rows = [clamped halo, main tile rows, clamped halo].
    x_ext = [
        jnp.concatenate([x_top[ci:ci + 1], x_main[ci], x_bot[ci:ci + 1]], axis=0)
        for ci in range(cin)
    ]

    # NOTE: for large Cin/Cout this unrolled VPU contraction should be replaced by an
    # MXU channel matmul with 128/256-aligned channel tiles; the tiny-channel regime
    # exercised here wastes the MXU, so the conv stays on the VPU.
    for co in range(cout):
        acc = x_ext[0] * wv[co:co + 1, 0:1]
        for ci in range(1, cin):
            acc = acc + x_ext[ci] * wv[co:co + 1, ci:ci + 1]
        acc = acc + bv[co:co + 1, :]
        y = jnp.where(acc > 0, acc, 0.1 * acc)                   # LeakyReLU(0.1)
        rows = jnp.dot(R, y, preferred_element_type=jnp.float32)       # (2*TH, W)
        out_ref[0, co, :, :] = jnp.dot(rows, S,
                                       preferred_element_type=jnp.float32)  # (2*TH, 2*W)


# ----------------------------------------------------------------------------
# Wrapper reproducing _router_v3.forward (NCHW in / NCHW out, eval-mode BN).
# ----------------------------------------------------------------------------
def router_v3_forward(x1_nchw, x2_nchw, w, gamma, beta, run_mean, run_var,
                      eps=1e-5, tile_rows=None):
    # TODO(synk): BatchNorm training-mode (batch statistics) semantics are not reproduced;
    # eval-mode running stats are folded into the conv weight / bias below.
    n, cin, h, wdt = x1_nchw.shape
    cout = w.shape[0]                      # w: (Cout, Cin) = squeezed Conv2d weight
    c2 = x2_nchw.shape[1]

    scale = (gamma / jnp.sqrt(run_var + eps)).astype(jnp.float32)
    wf = w.astype(jnp.float32) * scale[:, None]                       # (Cout, Cin)
    bias2 = (beta - run_mean * scale).astype(jnp.float32)[:, None]    # (Cout, 1)

    th = _pick_tile_rows(h, wdt, cout, tile_rows)
    n_tiles = h // th

    x1f = x1_nchw.astype(jnp.float32)
    # Clamped halo rows per tile, laid out so BlockSpecs keep full trailing dims.
    top_idx = np.maximum(np.arange(n_tiles, dtype=np.int32) * th - 1, 0)
    bot_idx = np.minimum(np.arange(n_tiles, dtype=np.int32) * th + th, h - 1)
    halo_top = jnp.transpose(x1f[:, :, top_idx, :], (0, 2, 1, 3))   # (N, n_tiles, Cin, W)
    halo_bot = jnp.transpose(x1f[:, :, bot_idx, :], (0, 2, 1, 3))

    rmat = _row_interp_matrix(th)          # (2*TH, TH+2)
    smat = _col_interp_matrix(wdt)         # (W, 2*W)

    h2, w2 = 2 * h, 2 * wdt
    # Module's F.pad on x2, keeping its diffX/diffY axis-naming quirk:
    # diffX (height diff) pads the width axis, diffY (width diff) pads the height axis.
    diff_x = int(h2 - x2_nchw.shape[2])
    diff_y = int(w2 - x2_nchw.shape[3])
    pad_w = (diff_x // 2, int(diff_x / 2))
    pad_h = (diff_y // 2, int(diff_y / 2))

    # Final output buffer with padded x2 already placed at channels [Cout:).
    base = lax.pad(x2_nchw.astype(jnp.float32), jnp.float32(0.0),
                   [(0, 0, 0), (cout, 0, 0),
                    (pad_h[0], pad_h[1], 0), (pad_w[0], pad_w[1], 0)])
    if base.shape != (n, cout + c2, h2, w2):
        raise ValueError(
            f"padded x2 spatial {base.shape[2:]} != upsampled x1 {(h2, w2)}; "
            "torch.cat in the original module would fail for these sizes")

    out = pl.pallas_call(
        _router_kernel,
        out_shape=jax.ShapeDtypeStruct(base.shape, jnp.float32),
        grid_spec=pltpu.PrefetchScalarGridSpec(
            num_scalar_prefetch=0,
            grid=(n, n_tiles),
            in_specs=[
                pl.BlockSpec((1, cin, th, wdt), lambda i, t: (i, 0, t, 0)),
                pl.BlockSpec((1, 1, cin, wdt), lambda i, t: (i, t, 0, 0)),
                pl.BlockSpec((1, 1, cin, wdt), lambda i, t: (i, t, 0, 0)),
                pl.BlockSpec((2 * th, th + 2), lambda i, t: (0, 0)),
                pl.BlockSpec((wdt, 2 * wdt), lambda i, t: (0, 0)),
                pl.BlockSpec((cout, cin), lambda i, t: (0, 0)),
                pl.BlockSpec((cout, 1), lambda i, t: (0, 0)),
                pl.BlockSpec(memory_space=pl.ANY),   # aliased output buffer (no auto-DMA)
            ],
            out_specs=pl.BlockSpec((1, cout, 2 * th, 2 * wdt),
                                   lambda i, t: (i, 0, t, 0)),
        ),
        input_output_aliases={7: 0},
        compiler_params=pltpu.CompilerParams(
            dimension_semantics=("parallel", "parallel"),
            vmem_limit_bytes=32 * 1024 * 1024),
    )(x1f, halo_top, halo_bot, rmat, smat, wf, bias2, base)
    return out


# ----------------------------------------------------------------------------
# Pure-JAX reference of the conv+BN+LeakyReLU+upsample branch (independent path).
# ----------------------------------------------------------------------------
def _ref_branch(x1, w, gamma, beta, mean, var, eps=1e-5):
    n, cin, h, wdt = x1.shape
    cout = w.shape[0]
    scale = gamma / jnp.sqrt(var + eps)
    bias = beta - mean * scale
    y = jnp.einsum("nchw,oc->nohw", x1.astype(jnp.float32), w.astype(jnp.float32),
                   precision=jax.lax.Precision.HIGHEST)
    y = y * scale[None, :, None, None] + bias[None, :, None, None]
    y = jnp.where(y > 0, y, 0.1 * y)
    yp = jnp.concatenate([y[:, :, :1], y[:, :, :-1]], axis=2)
    yn = jnp.concatenate([y[:, :, 1:], y[:, :, -1:]], axis=2)
    re = 0.75 * y + 0.25 * yp
    ro = 0.75 * y + 0.25 * yn
    hh = jnp.stack([re, ro], axis=3).reshape(n, cout, 2 * h, wdt)
    hp = jnp.concatenate([hh[..., :1], hh[..., :-1]], axis=3)
    hn = jnp.concatenate([hh[..., 1:], hh[..., -1:]], axis=3)
    we = 0.75 * hh + 0.25 * hp
    wo = 0.75 * hh + 0.25 * hn
    return jnp.stack([we, wo], axis=4).reshape(n, cout, 2 * h, 2 * wdt)


if __name__ == "__main__":
    key = jax.random.PRNGKey(0)
    k1, k2, k3 = jax.random.split(key, 3)

    N, Cin, Cout = 2, 4, 8
    H1, W1 = 16, 16              # x1 spatial -> upsampled to 32x32
    C2, H2, W2 = 3, 30, 30       # x2 gets padded by 1 on each side to 32x32

    x1 = jax.random.normal(k1, (N, Cin, H1, W1), dtype=jnp.float32)
    x2 = jax.random.normal(k2, (N, C2, H2, W2), dtype=jnp.float32)

    # synthetic Conv2d(inp, oup, 1, bias=False) + BatchNorm2d(oup) parameters
    w = jax.random.normal(k3, (Cout, Cin), dtype=jnp.float32) * 0.1
    gamma = jnp.linspace(0.5, 1.5, Cout, dtype=jnp.float32)
    beta = jnp.linspace(-0.1, 0.1, Cout, dtype=jnp.float32)
    run_mean = jnp.linspace(-0.2, 0.2, Cout, dtype=jnp.float32)
    run_var = jnp.linspace(0.8, 1.2, Cout, dtype=jnp.float32)

    # multi-tile path (2 row-tiles -> exercises the halo/clamp logic across tiles)
    out = router_v3_forward(x1, x2, w, gamma, beta, run_mean, run_var, tile_rows=8)
    out = jax.block_until_ready(out)
    assert out.shape == (N, Cout + C2, 2 * H1, 2 * W1), out.shape

    ref_up = _ref_branch(x1, w, gamma, beta, run_mean, run_var)
    assert jnp.allclose(out[:, :Cout], ref_up, atol=2e-5, rtol=1e-4)
    # padded x2 occupies the trailing channels (1-pixel zero border)
    assert jnp.allclose(out[:, Cout:, 1:-1, 1:-1], x2, atol=1e-6)
    assert float(jnp.max(jnp.abs(out[:, Cout:, 0, :]))) == 0.0

    # default (auto) tiling path: whole H in one row-tile at these sizes
    out2 = jax.block_until_ready(
        router_v3_forward(x1, x2, w, gamma, beta, run_mean, run_var))
    assert jnp.allclose(out2, out, atol=2e-5, rtol=1e-4)

    print("KERNEL_OK")
</pallas_src>

<mosaic_0001>
module attributes {stable_mosaic.version = 11 : i64} {
  func.func @_router_kernel(%arg0: i32, %arg1: i32, %arg2: memref<1x4x8x16xf32, #tpu.memory_space<vmem>>, %arg3: memref<1x1x4x16xf32, #tpu.memory_space<vmem>>, %arg4: memref<1x1x4x16xf32, #tpu.memory_space<vmem>>, %arg5: memref<16x10xf32, #tpu.memory_space<vmem>>, %arg6: memref<16x32xf32, #tpu.memory_space<vmem>>, %arg7: memref<8x4xf32, #tpu.memory_space<vmem>>, %arg8: memref<8x1xf32, #tpu.memory_space<vmem>>, %arg9: memref<2x11x32x32xf32, #tpu.memory_space<any>>, %arg10: memref<1x8x16x32xf32, #tpu.memory_space<vmem>>) attributes {dimension_semantics = [#tpu.dimension_semantics<parallel>, #tpu.dimension_semantics<parallel>], iteration_bounds = array<i64: 2, 2>, scalar_prefetch = 0 : i64, scratch_operands = 0 : i64, tpu.core_type = #tpu.core_type<tc>, window_params = [{transform_indices = @transform_0, window_bounds = array<i64: 1, 4, 8, 16>}, {transform_indices = @transform_1, window_bounds = array<i64: 1, 1, 4, 16>}, {transform_indices = @transform_2, window_bounds = array<i64: 1, 1, 4, 16>}, {pipeline_mode = #tpu.pipeline_mode<synchronous>, transform_indices = @transform_3, window_bounds = array<i64: 16, 10>}, {pipeline_mode = #tpu.pipeline_mode<synchronous>, transform_indices = @transform_4, window_bounds = array<i64: 16, 32>}, {pipeline_mode = #tpu.pipeline_mode<synchronous>, transform_indices = @transform_5, window_bounds = array<i64: 8, 4>}, {pipeline_mode = #tpu.pipeline_mode<synchronous>, transform_indices = @transform_6, window_bounds = array<i64: 8, 1>}, {}, {transform_indices = @transform_8, window_bounds = array<i64: 1, 8, 16, 32>}]} {
    %c0 = arith.constant 0 : index
    %c0_0 = arith.constant 0 : index
    %c0_1 = arith.constant 0 : index
    %c0_2 = arith.constant 0 : index
    %0 = vector.load %arg2[%c0, %c0_0, %c0_1, %c0_2] : memref<1x4x8x16xf32, #tpu.memory_space<vmem>>, vector<1x4x8x16xf32>
    %1 = vector.shape_cast %0 : vector<1x4x8x16xf32> to vector<4x8x16xf32>
    %c0_3 = arith.constant 0 : index
    %c0_4 = arith.constant 0 : index
    %c0_5 = arith.constant 0 : index
    %c0_6 = arith.constant 0 : index
    %2 = vector.load %arg3[%c0_3, %c0_4, %c0_5, %c0_6] : memref<1x1x4x16xf32, #tpu.memory_space<vmem>>, vector<1x1x4x16xf32>
    %3 = vector.shape_cast %2 : vector<1x1x4x16xf32> to vector<4x16xf32>
    %c0_7 = arith.constant 0 : index
    %c0_8 = arith.constant 0 : index
    %c0_9 = arith.constant 0 : index
    %c0_10 = arith.constant 0 : index
    %4 = vector.load %arg4[%c0_7, %c0_8, %c0_9, %c0_10] : memref<1x1x4x16xf32, #tpu.memory_space<vmem>>, vector<1x1x4x16xf32>
    %5 = vector.shape_cast %4 : vector<1x1x4x16xf32> to vector<4x16xf32>
    %c0_11 = arith.constant 0 : index
    %c0_12 = arith.constant 0 : index
    %6 = vector.load %arg5[%c0_11, %c0_12] : memref<16x10xf32, #tpu.memory_space<vmem>>, vector<16x10xf32>
    %c0_13 = arith.constant 0 : index
    %c0_14 = arith.constant 0 : index
    %7 = vector.load %arg6[%c0_13, %c0_14] : memref<16x32xf32, #tpu.memory_space<vmem>>, vector<16x32xf32>
    %c0_15 = arith.constant 0 : index
    %c0_16 = arith.constant 0 : index
    %8 = vector.load %arg7[%c0_15, %c0_16] : memref<8x4xf32, #tpu.memory_space<vmem>>, vector<8x4xf32>
    %c0_17 = arith.constant 0 : index
    %c0_18 = arith.constant 0 : index
    %9 = vector.load %arg8[%c0_17, %c0_18] : memref<8x1xf32, #tpu.memory_space<vmem>>, vector<8x1xf32>
    %10 = vector.extract_strided_slice %3 {offsets = [0, 0], sizes = [1, 16], strides = [1, 1]} : vector<4x16xf32> to vector<1x16xf32>
    %11 = vector.extract_strided_slice %1 {offsets = [0, 0, 0], sizes = [1, 8, 16], strides = [1, 1, 1]} : vector<4x8x16xf32> to vector<1x8x16xf32>
    %12 = vector.shape_cast %11 : vector<1x8x16xf32> to vector<8x16xf32>
    %13 = vector.extract_strided_slice %5 {offsets = [0, 0], sizes = [1, 16], strides = [1, 1]} : vector<4x16xf32> to vector<1x16xf32>
    %14 = tpu.concatenate %10, %12, %13 in 0 : vector<1x16xf32>, vector<8x16xf32>, vector<1x16xf32> -> vector<10x16xf32>
    %15 = vector.extract_strided_slice %3 {offsets = [1, 0], sizes = [1, 16], strides = [1, 1]} : vector<4x16xf32> to vector<1x16xf32>
    %16 = vector.extract_strided_slice %1 {offsets = [1, 0, 0], sizes = [1, 8, 16], strides = [1, 1, 1]} : vector<4x8x16xf32> to vector<1x8x16xf32>
    %17 = vector.shape_cast %16 : vector<1x8x16xf32> to vector<8x16xf32>
    %18 = vector.extract_strided_slice %5 {offsets = [1, 0], sizes = [1, 16], strides = [1, 1]} : vector<4x16xf32> to vector<1x16xf32>
    %19 = tpu.concatenate %15, %17, %18 in 0 : vector<1x16xf32>, vector<8x16xf32>, vector<1x16xf32> -> vector<10x16xf32>
    %20 = vector.extract_strided_slice %3 {offsets = [2, 0], sizes = [1, 16], strides = [1, 1]} : vector<4x16xf32> to vector<1x16xf32>
    %21 = vector.extract_strided_slice %1 {offsets = [2, 0, 0], sizes = [1, 8, 16], strides = [1, 1, 1]} : vector<4x8x16xf32> to vector<1x8x16xf32>
    %22 = vector.shape_cast %21 : vector<1x8x16xf32> to vector<8x16xf32>
    %23 = vector.extract_strided_slice %5 {offsets = [2, 0], sizes = [1, 16], strides = [1, 1]} : vector<4x16xf32> to vector<1x16xf32>
    %24 = tpu.concatenate %20, %22, %23 in 0 : vector<1x16xf32>, vector<8x16xf32>, vector<1x16xf32> -> vector<10x16xf32>
    %25 = vector.extract_strided_slice %3 {offsets = [3, 0], sizes = [1, 16], strides = [1, 1]} : vector<4x16xf32> to vector<1x16xf32>
    %26 = vector.extract_strided_slice %1 {offsets = [3, 0, 0], sizes = [1, 8, 16], strides = [1, 1, 1]} : vector<4x8x16xf32> to vector<1x8x16xf32>
    %27 = vector.shape_cast %26 : vector<1x8x16xf32> to vector<8x16xf32>
    %28 = vector.extract_strided_slice %5 {offsets = [3, 0], sizes = [1, 16], strides = [1, 1]} : vector<4x16xf32> to vector<1x16xf32>
    %29 = tpu.concatenate %25, %27, %28 in 0 : vector<1x16xf32>, vector<8x16xf32>, vector<1x16xf32> -> vector<10x16xf32>
    %30 = vector.extract_strided_slice %8 {offsets = [0, 0], sizes = [1, 1], strides = [1, 1]} : vector<8x4xf32> to vector<1x1xf32>
    %31 = vector.broadcast %30 : vector<1x1xf32> to vector<10x16xf32>
    %32 = arith.mulf %14, %31 : vector<10x16xf32>
    %33 = vector.extract_strided_slice %8 {offsets = [0, 1], sizes = [1, 1], strides = [1, 1]} : vector<8x4xf32> to vector<1x1xf32>
    %34 = vector.broadcast %33 : vector<1x1xf32> to vector<10x16xf32>
    %35 = arith.mulf %19, %34 : vector<10x16xf32>
    %36 = arith.addf %32, %35 : vector<10x16xf32>
    %37 = vector.extract_strided_slice %8 {offsets = [0, 2], sizes = [1, 1], strides = [1, 1]} : vector<8x4xf32> to vector<1x1xf32>
    %38 = vector.broadcast %37 : vector<1x1xf32> to vector<10x16xf32>
    %39 = arith.mulf %24, %38 : vector<10x16xf32>
    %40 = arith.addf %36, %39 : vector<10x16xf32>
    %41 = vector.extract_strided_slice %8 {offsets = [0, 3], sizes = [1, 1], strides = [1, 1]} : vector<8x4xf32> to vector<1x1xf32>
    %42 = vector.broadcast %41 : vector<1x1xf32> to vector<10x16xf32>
    %43 = arith.mulf %29, %42 : vector<10x16xf32>
    %44 = arith.addf %40, %43 : vector<10x16xf32>
    %45 = vector.extract_strided_slice %9 {offsets = [0, 0], sizes = [1, 1], strides = [1, 1]} : vector<8x1xf32> to vector<1x1xf32>
    %46 = vector.broadcast %45 : vector<1x1xf32> to vector<10x16xf32>
    %47 = arith.addf %44, %46 : vector<10x16xf32>
    %cst = arith.constant 0.000000e+00 : f32
    %48 = vector.broadcast %cst : f32 to vector<10x16xf32>
    %49 = arith.cmpf ogt, %47, %48 : vector<10x16xf32>
    %cst_19 = arith.constant 1.000000e-01 : f32
    %50 = vector.broadcast %cst_19 : f32 to vector<10x16xf32>
    %51 = arith.mulf %50, %47 : vector<10x16xf32>
    %52 = arith.select %49, %47, %51 : vector<10x16xi1>, vector<10x16xf32>
    %cst_20 = arith.constant dense<0.000000e+00> : vector<16x16xf32>
    %53 = tpu.matmul %6, %52, %cst_20 {dimension_numbers = #tpu.dot_dimension_numbers<[1], [0], [0], [1], [0, 0, 1, 1], [], []>} : vector<16x10xf32>, vector<10x16xf32>, vector<16x16xf32> -> vector<16x16xf32>
    %cst_21 = arith.constant dense<0.000000e+00> : vector<16x32xf32>
    %54 = tpu.matmul %53, %7, %cst_21 {dimension_numbers = #tpu.dot_dimension_numbers<[1], [0], [0], [1], [0, 0, 1, 1], [], []>} : vector<16x16xf32>, vector<16x32xf32>, vector<16x32xf32> -> vector<16x32xf32>
    %c0_22 = arith.constant 0 : index
    %c0_23 = arith.constant 0 : index
    %c0_24 = arith.constant 0 : index
    %c0_25 = arith.constant 0 : index
    %55 = vector.load %arg10[%c0_22, %c0_23, %c0_24, %c0_25] : memref<1x8x16x32xf32, #tpu.memory_space<vmem>>, vector<1x1x16x32xf32>
    %56 = vector.shape_cast %55 : vector<1x1x16x32xf32> to vector<16x32xf32>
    %57 = vector.shape_cast %54 : vector<16x32xf32> to vector<1x1x16x32xf32>
    tpu.vector_store %arg10[%c0_22, %c0_23, %c0_24, %c0_25], %57 {strides = array<i32>} : memref<1x8x16x32xf32, #tpu.memory_space<vmem>>, vector<1x1x16x32xf32>,
    %58 = vector.extract_strided_slice %8 {offsets = [1, 0], sizes = [1, 1], strides = [1, 1]} : vector<8x4xf32> to vector<1x1xf32>
    %59 = vector.broadcast %58 : vector<1x1xf32> to vector<10x16xf32>
    %60 = arith.mulf %14, %59 : vector<10x16xf32>
    %61 = vector.extract_strided_slice %8 {offsets = [1, 1], sizes = [1, 1], strides = [1, 1]} : vector<8x4xf32> to vector<1x1xf32>
    %62 = vector.broadcast %61 : vector<1x1xf32> to vector<10x16xf32>
    %63 = arith.mulf %19, %62 : vector<10x16xf32>
    %64 = arith.addf %60, %63 : vector<10x16xf32>
    %65 = vector.extract_strided_slice %8 {offsets = [1, 2], sizes = [1, 1], strides = [1, 1]} : vector<8x4xf32> to vector<1x1xf32>
    %66 = vector.broadcast %65 : vector<1x1xf32> to vector<10x16xf32>
    %67 = arith.mulf %24, %66 : vector<10x16xf32>
    %68 = arith.addf %64, %67 : vector<10x16xf32>
    %69 = vector.extract_strided_slice %8 {offsets = [1, 3], sizes = [1, 1], strides = [1, 1]} : vector<8x4xf32> to vector<1x1xf32>
    %70 = vector.broadcast %69 : vector<1x1xf32> to vector<10x16xf32>
    %71 = arith.mulf %29, %70 : vector<10x16xf32>
    %72 = arith.addf %68, %71 : vector<10x16xf32>
    %73 = vector.extract_strided_slice %9 {offsets = [1, 0], sizes = [1, 1], strides = [1, 1]} : vector<8x1xf32> to vector<1x1xf32>
    %74 = vector.broadcast %73 : vector<1x1xf32> to vector<10x16xf32>
    %75 = arith.addf %72, %74 : vector<10x16xf32>
    %cst_26 = arith.constant 0.000000e+00 : f32
    %76 = vector.broadcast %cst_26 : f32 to vector<10x16xf32>
    %77 = arith.cmpf ogt, %75, %76 : vector<10x16xf32>
    %cst_27 = arith.constant 1.000000e-01 : f32
    %78 = vector.broadcast %cst_27 : f32 to vector<10x16xf32>
    %79 = arith.mulf %78, %75 : vector<10x16xf32>
    %80 = arith.select %77, %75, %79 : vector<10x16xi1>, vector<10x16xf32>
    %cst_28 = arith.constant dense<0.000000e+00> : vector<16x16xf32>
    %81 = tpu.matmul %6, %80, %cst_28 {dimension_numbers = #tpu.dot_dimension_numbers<[1], [0], [0], [1], [0, 0, 1, 1], [], []>} : vector<16x10xf32>, vector<10x16xf32>, vector<16x16xf32> -> vector<16x16xf32>
    %cst_29 = arith.constant dense<0.000000e+00> : vector<16x32xf32>
    %82 = tpu.matmul %81, %7, %cst_29 {dimension_numbers = #tpu.dot_dimension_numbers<[1], [0], [0], [1], [0, 0, 1, 1], [], []>} : vector<16x16xf32>, vector<16x32xf32>, vector<16x32xf32> -> vector<16x32xf32>
    %c0_30 = arith.constant 0 : index
    %c1 = arith.constant 1 : index
    %c0_31 = arith.constant 0 : index
    %c0_32 = arith.constant 0 : index
    %83 = vector.load %arg10[%c0_30, %c1, %c0_31, %c0_32] : memref<1x8x16x32xf32, #tpu.memory_space<vmem>>, vector<1x1x16x32xf32>
    %84 = vector.shape_cast %83 : vector<1x1x16x32xf32> to vector<16x32xf32>
    %85 = vector.shape_cast %82 : vector<16x32xf32> to vector<1x1x16x32xf32>
    tpu.vector_store %arg10[%c0_30, %c1, %c0_31, %c0_32], %85 {strides = array<i32>} : memref<1x8x16x32xf32, #tpu.memory_space<vmem>>, vector<1x1x16x32xf32>,
    %86 = vector.extract_strided_slice %8 {offsets = [2, 0], sizes = [1, 1], strides = [1, 1]} : vector<8x4xf32> to vector<1x1xf32>
    %87 = vector.broadcast %86 : vector<1x1xf32> to vector<10x16xf32>
    %88 = arith.mulf %14, %87 : vector<10x16xf32>
    %89 = vector.extract_strided_slice %8 {offsets = [2, 1], sizes = [1, 1], strides = [1, 1]} : vector<8x4xf32> to vector<1x1xf32>
    %90 = vector.broadcast %89 : vector<1x1xf32> to vector<10x16xf32>
    %91 = arith.mulf %19, %90 : vector<10x16xf32>
    %92 = arith.addf %88, %91 : vector<10x16xf32>
    %93 = vector.extract_strided_slice %8 {offsets = [2, 2], sizes = [1, 1], strides = [1, 1]} : vector<8x4xf32> to vector<1x1xf32>
    %94 = vector.broadcast %93 : vector<1x1xf32> to vector<10x16xf32>
    %95 = arith.mulf %24, %94 : vector<10x16xf32>
    %96 = arith.addf %92, %95 : vector<10x16xf32>
    %97 = vector.extract_strided_slice %8 {offsets = [2, 3], sizes = [1, 1], strides = [1, 1]} : vector<8x4xf32> to vector<1x1xf32>
    %98 = vector.broadcast %97 : vector<1x1xf32> to vector<10x16xf32>
    %99 = arith.mulf %29, %98 : vector<10x16xf32>
    %100 = arith.addf %96, %99 : vector<10x16xf32>
    %101 = vector.extract_strided_slice %9 {offsets = [2, 0], sizes = [1, 1], strides = [1, 1]} : vector<8x1xf32> to vector<1x1xf32>
    %102 = vector.broadcast %101 : vector<1x1xf32> to vector<10x16xf32>
    %103 = arith.addf %100, %102 : vector<10x16xf32>
    %cst_33 = arith.constant 0.000000e+00 : f32
    %104 = vector.broadcast %cst_33 : f32 to vector<10x16xf32>
    %105 = arith.cmpf ogt, %103, %104 : vector<10x16xf32>
    %cst_34 = arith.constant 1.000000e-01 : f32
    %106 = vector.broadcast %cst_34 : f32 to vector<10x16xf32>
    %107 = arith.mulf %106, %103 : vector<10x16xf32>
    %108 = arith.select %105, %103, %107 : vector<10x16xi1>, vector<10x16xf32>
    %cst_35 = arith.constant dense<0.000000e+00> : vector<16x16xf32>
    %109 = tpu.matmul %6, %108, %cst_35 {dimension_numbers = #tpu.dot_dimension_numbers<[1], [0], [0], [1], [0, 0, 1, 1], [], []>} : vector<16x10xf32>, vector<10x16xf32>, vector<16x16xf32> -> vector<16x16xf32>
    %cst_36 = arith.constant dense<0.000000e+00> : vector<16x32xf32>
    %110 = tpu.matmul %109, %7, %cst_36 {dimension_numbers = #tpu.dot_dimension_numbers<[1], [0], [0], [1], [0, 0, 1, 1], [], []>} : vector<16x16xf32>, vector<16x32xf32>, vector<16x32xf32> -> vector<16x32xf32>
    %c0_37 = arith.constant 0 : index
    %c2 = arith.constant 2 : index
    %c0_38 = arith.constant 0 : index
    %c0_39 = arith.constant 0 : index
    %111 = vector.load %arg10[%c0_37, %c2, %c0_38, %c0_39] : memref<1x8x16x32xf32, #tpu.memory_space<vmem>>, vector<1x1x16x32xf32>
    %112 = vector.shape_cast %111 : vector<1x1x16x32xf32> to vector<16x32xf32>
    %113 = vector.shape_cast %110 : vector<16x32xf32> to vector<1x1x16x32xf32>
    tpu.vector_store %arg10[%c0_37, %c2, %c0_38, %c0_39], %113 {strides = array<i32>} : memref<1x8x16x32xf32, #tpu.memory_space<vmem>>, vector<1x1x16x32xf32>,
    %114 = vector.extract_strided_slice %8 {offsets = [3, 0], sizes = [1, 1], strides = [1, 1]} : vector<8x4xf32> to vector<1x1xf32>
    %115 = vector.broadcast %114 : vector<1x1xf32> to vector<10x16xf32>
    %116 = arith.mulf %14, %115 : vector<10x16xf32>
    %117 = vector.extract_strided_slice %8 {offsets = [3, 1], sizes = [1, 1], strides = [1, 1]} : vector<8x4xf32> to vector<1x1xf32>
    %118 = vector.broadcast %117 : vector<1x1xf32> to vector<10x16xf32>
    %119 = arith.mulf %19, %118 : vector<10x16xf32>
    %120 = arith.addf %116, %119 : vector<10x16xf32>
    %121 = vector.extract_strided_slice %8 {offsets = [3, 2], sizes = [1, 1], strides = [1, 1]} : vector<8x4xf32> to vector<1x1xf32>
    %122 = vector.broadcast %121 : vector<1x1xf32> to vector<10x16xf32>
    %123 = arith.mulf %24, %122 : vector<10x16xf32>
    %124 = arith.addf %120, %123 : vector<10x16xf32>
    %125 = vector.extract_strided_slice %8 {offsets = [3, 3], sizes = [1, 1], strides = [1, 1]} : vector<8x4xf32> to vector<1x1xf32>
    %126 = vector.broadcast %125 : vector<1x1xf32> to vector<10x16xf32>
    %127 = arith.mulf %29, %126 : vector<10x16xf32>
    %128 = arith.addf %124, %127 : vector<10x16xf32>
    %129 = vector.extract_strided_slice %9 {offsets = [3, 0], sizes = [1, 1], strides = [1, 1]} : vector<8x1xf32> to vector<1x1xf32>
    %130 = vector.broadcast %129 : vector<1x1xf32> to vector<10x16xf32>
    %131 = arith.addf %128, %130 : vector<10x16xf32>
    %cst_40 = arith.constant 0.000000e+00 : f32
    %132 = vector.broadcast %cst_40 : f32 to vector<10x16xf32>
    %133 = arith.cmpf ogt, %131, %132 : vector<10x16xf32>
    %cst_41 = arith.constant 1.000000e-01 : f32
    %134 = vector.broadcast %cst_41 : f32 to vector<10x16xf32>
    %135 = arith.mulf %134, %131 : vector<10x16xf32>
    %136 = arith.select %133, %131, %135 : vector<10x16xi1>, vector<10x16xf32>
    %cst_42 = arith.constant dense<0.000000e+00> : vector<16x16xf32>
    %137 = tpu.matmul %6, %136, %cst_42 {dimension_numbers = #tpu.dot_dimension_numbers<[1], [0], [0], [1], [0, 0, 1, 1], [], []>} : vector<16x10xf32>, vector<10x16xf32>, vector<16x16xf32> -> vector<16x16xf32>
    %cst_43 = arith.constant dense<0.000000e+00> : vector<16x32xf32>
    %138 = tpu.matmul %137, %7, %cst_43 {dimension_numbers = #tpu.dot_dimension_numbers<[1], [0], [0], [1], [0, 0, 1, 1], [], []>} : vector<16x16xf32>, vector<16x32xf32>, vector<16x32xf32> -> vector<16x32xf32>
    %c0_44 = arith.constant 0 : index
    %c3 = arith.constant 3 : index
    %c0_45 = arith.constant 0 : index
    %c0_46 = arith.constant 0 : index
    %139 = vector.load %arg10[%c0_44, %c3, %c0_45, %c0_46] : memref<1x8x16x32xf32, #tpu.memory_space<vmem>>, vector<1x1x16x32xf32>
    %140 = vector.shape_cast %139 : vector<1x1x16x32xf32> to vector<16x32xf32>
    %141 = vector.shape_cast %138 : vector<16x32xf32> to vector<1x1x16x32xf32>
    tpu.vector_store %arg10[%c0_44, %c3, %c0_45, %c0_46], %141 {strides = array<i32>} : memref<1x8x16x32xf32, #tpu.memory_space<vmem>>, vector<1x1x16x32xf32>,
    %142 = vector.extract_strided_slice %8 {offsets = [4, 0], sizes = [1, 1], strides = [1, 1]} : vector<8x4xf32> to vector<1x1xf32>
    %143 = vector.broadcast %142 : vector<1x1xf32> to vector<10x16xf32>
    %144 = arith.mulf %14, %143 : vector<10x16xf32>
    %145 = vector.extract_strided_slice %8 {offsets = [4, 1], sizes = [1, 1], strides = [1, 1]} : vector<8x4xf32> to vector<1x1xf32>
    %146 = vector.broadcast %145 : vector<1x1xf32> to vector<10x16xf32>
    %147 = arith.mulf %19, %146 : vector<10x16xf32>
    %148 = arith.addf %144, %147 : vector<10x16xf32>
    %149 = vector.extract_strided_slice %8 {offsets = [4, 2], sizes = [1, 1], strides = [1, 1]} : vector<8x4xf32> to vector<1x1xf32>
    %150 = vector.broadcast %149 : vector<1x1xf32> to vector<10x16xf32>
    %151 = arith.mulf %24, %150 : vector<10x16xf32>
    %152 = arith.addf %148, %151 : vector<10x16xf32>
    %153 = vector.extract_strided_slice %8 {offsets = [4, 3], sizes = [1, 1], strides = [1, 1]} : vector<8x4xf32> to vector<1x1xf32>
    %154 = vector.broadcast %153 : vector<1x1xf32> to vector<10x16xf32>
    %155 = arith.mulf %29, %154 : vector<10x16xf32>
    %156 = arith.addf %152, %155 : vector<10x16xf32>
    %157 = vector.extract_strided_slice %9 {offsets = [4, 0], sizes = [1, 1], strides = [1, 1]} : vector<8x1xf32> to vector<1x1xf32>
    %158 = vector.broadcast %157 : vector<1x1xf32> to vector<10x16xf32>
    %159 = arith.addf %156, %158 : vector<10x16xf32>
    %cst_47 = arith.constant 0.000000e+00 : f32
    %160 = vector.broadcast %cst_47 : f32 to vector<10x16xf32>
    %161 = arith.cmpf ogt, %159, %160 : vector<10x16xf32>
    %cst_48 = arith.constant 1.000000e-01 : f32
    %162 = vector.broadcast %cst_48 : f32 to vector<10x16xf32>
    %163 = arith.mulf %162, %159 : vector<10x16xf32>
    %164 = arith.select %161, %159, %163 : vector<10x16xi1>, vector<10x16xf32>
    %cst_49 = arith.constant dense<0.000000e+00> : vector<16x16xf32>
    %165 = tpu.matmul %6, %164, %cst_49 {dimension_numbers = #tpu.dot_dimension_numbers<[1], [0], [0], [1], [0, 0, 1, 1], [], []>} : vector<16x10xf32>, vector<10x16xf32>, vector<16x16xf32> -> vector<16x16xf32>
    %cst_50 = arith.constant dense<0.000000e+00> : vector<16x32xf32>
    %166 = tpu.matmul %165, %7, %cst_50 {dimension_numbers = #tpu.dot_dimension_numbers<[1], [0], [0], [1], [0, 0, 1, 1], [], []>} : vector<16x16xf32>, vector<16x32xf32>, vector<16x32xf32> -> vector<16x32xf32>
    %c0_51 = arith.constant 0 : index
    %c4 = arith.constant 4 : index
    %c0_52 = arith.constant 0 : index
    %c0_53 = arith.constant 0 : index
    %167 = vector.load %arg10[%c0_51, %c4, %c0_52, %c0_53] : memref<1x8x16x32xf32, #tpu.memory_space<vmem>>, vector<1x1x16x32xf32>
    %168 = vector.shape_cast %167 : vector<1x1x16x32xf32> to vector<16x32xf32>
    %169 = vector.shape_cast %166 : vector<16x32xf32> to vector<1x1x16x32xf32>
    tpu.vector_store %arg10[%c0_51, %c4, %c0_52, %c0_53], %169 {strides = array<i32>} : memref<1x8x16x32xf32, #tpu.memory_space<vmem>>, vector<1x1x16x32xf32>,
    %170 = vector.extract_strided_slice %8 {offsets = [5, 0], sizes = [1, 1], strides = [1, 1]} : vector<8x4xf32> to vector<1x1xf32>
    %171 = vector.broadcast %170 : vector<1x1xf32> to vector<10x16xf32>
    %172 = arith.mulf %14, %171 : vector<10x16xf32>
    %173 = vector.extract_strided_slice %8 {offsets = [5, 1], sizes = [1, 1], strides = [1, 1]} : vector<8x4xf32> to vector<1x1xf32>
    %174 = vector.broadcast %173 : vector<1x1xf32> to vector<10x16xf32>
    %175 = arith.mulf %19, %174 : vector<10x16xf32>
    %176 = arith.addf %172, %175 : vector<10x16xf32>
    %177 = vector.extract_strided_slice %8 {offsets = [5, 2], sizes = [1, 1], strides = [1, 1]} : vector<8x4xf32> to vector<1x1xf32>
    %178 = vector.broadcast %177 : vector<1x1xf32> to vector<10x16xf32>
    %179 = arith.mulf %24, %178 : vector<10x16xf32>
    %180 = arith.addf %176, %179 : vector<10x16xf32>
    %181 = vector.extract_strided_slice %8 {offsets = [5, 3], sizes = [1, 1], strides = [1, 1]} : vector<8x4xf32> to vector<1x1xf32>
    %182 = vector.broadcast %181 : vector<1x1xf32> to vector<10x16xf32>
    %183 = arith.mulf %29, %182 : vector<10x16xf32>
    %184 = arith.addf %180, %183 : vector<10x16xf32>
    %185 = vector.extract_strided_slice %9 {offsets = [5, 0], sizes = [1, 1], strides = [1, 1]} : vector<8x1xf32> to vector<1x1xf32>
    %186 = vector.broadcast %185 : vector<1x1xf32> to vector<10x16xf32>
    %187 = arith.addf %184, %186 : vector<10x16xf32>
    %cst_54 = arith.constant 0.000000e+00 : f32
    %188 = vector.broadcast %cst_54 : f32 to vector<10x16xf32>
    %189 = arith.cmpf ogt, %187, %188 : vector<10x16xf32>
    %cst_55 = arith.constant 1.000000e-01 : f32
    %190 = vector.broadcast %cst_55 : f32 to vector<10x16xf32>
    %191 = arith.mulf %190, %187 : vector<10x16xf32>
    %192 = arith.select %189, %187, %191 : vector<10x16xi1>, vector<10x16xf32>
    %cst_56 = arith.constant dense<0.000000e+00> : vector<16x16xf32>
    %193 = tpu.matmul %6, %192, %cst_56 {dimension_numbers = #tpu.dot_dimension_numbers<[1], [0], [0], [1], [0, 0, 1, 1], [], []>} : vector<16x10xf32>, vector<10x16xf32>, vector<16x16xf32> -> vector<16x16xf32>
    %cst_57 = arith.constant dense<0.000000e+00> : vector<16x32xf32>
    %194 = tpu.matmul %193, %7, %cst_57 {dimension_numbers = #tpu.dot_dimension_numbers<[1], [0], [0], [1], [0, 0, 1, 1], [], []>} : vector<16x16xf32>, vector<16x32xf32>, vector<16x32xf32> -> vector<16x32xf32>
    %c0_58 = arith.constant 0 : index
    %c5 = arith.constant 5 : index
    %c0_59 = arith.constant 0 : index
    %c0_60 = arith.constant 0 : index
    %195 = vector.load %arg10[%c0_58, %c5, %c0_59, %c0_60] : memref<1x8x16x32xf32, #tpu.memory_space<vmem>>, vector<1x1x16x32xf32>
    %196 = vector.shape_cast %195 : vector<1x1x16x32xf32> to vector<16x32xf32>
    %197 = vector.shape_cast %194 : vector<16x32xf32> to vector<1x1x16x32xf32>
    tpu.vector_store %arg10[%c0_58, %c5, %c0_59, %c0_60], %197 {strides = array<i32>} : memref<1x8x16x32xf32, #tpu.memory_space<vmem>>, vector<1x1x16x32xf32>,
    %198 = vector.extract_strided_slice %8 {offsets = [6, 0], sizes = [1, 1], strides = [1, 1]} : vector<8x4xf32> to vector<1x1xf32>
    %199 = vector.broadcast %198 : vector<1x1xf32> to vector<10x16xf32>
    %200 = arith.mulf %14, %199 : vector<10x16xf32>
    %201 = vector.extract_strided_slice %8 {offsets = [6, 1], sizes = [1, 1], strides = [1, 1]} : vector<8x4xf32> to vector<1x1xf32>
    %202 = vector.broadcast %201 : vector<1x1xf32> to vector<10x16xf32>
    %203 = arith.mulf %19, %202 : vector<10x16xf32>
    %204 = arith.addf %200, %203 : vector<10x16xf32>
    %205 = vector.extract_strided_slice %8 {offsets = [6, 2], sizes = [1, 1], strides = [1, 1]} : vector<8x4xf32> to vector<1x1xf32>
    %206 = vector.broadcast %205 : vector<1x1xf32> to vector<10x16xf32>
    %207 = arith.mulf %24, %206 : vector<10x16xf32>
    %208 = arith.addf %204, %207 : vector<10x16xf32>
    %209 = vector.extract_strided_slice %8 {offsets = [6, 3], sizes = [1, 1], strides = [1, 1]} : vector<8x4xf32> to vector<1x1xf32>
    %210 = vector.broadcast %209 : vector<1x1xf32> to vector<10x16xf32>
    %211 = arith.mulf %29, %210 : vector<10x16xf32>
    %212 = arith.addf %208, %211 : vector<10x16xf32>
    %213 = vector.extract_strided_slice %9 {offsets = [6, 0], sizes = [1, 1], strides = [1, 1]} : vector<8x1xf32> to vector<1x1xf32>
    %214 = vector.broadcast %213 : vector<1x1xf32> to vector<10x16xf32>
    %215 = arith.addf %212, %214 : vector<10x16xf32>
    %cst_61 = arith.constant 0.000000e+00 : f32
    %216 = vector.broadcast %cst_61 : f32 to vector<10x16xf32>
    %217 = arith.cmpf ogt, %215, %216 : vector<10x16xf32>
    %cst_62 = arith.constant 1.000000e-01 : f32
    %218 = vector.broadcast %cst_62 : f32 to vector<10x16xf32>
    %219 = arith.mulf %218, %215 : vector<10x16xf32>
    %220 = arith.select %217, %215, %219 : vector<10x16xi1>, vector<10x16xf32>
    %cst_63 = arith.constant dense<0.000000e+00> : vector<16x16xf32>
    %221 = tpu.matmul %6, %220, %cst_63 {dimension_numbers = #tpu.dot_dimension_numbers<[1], [0], [0], [1], [0, 0, 1, 1], [], []>} : vector<16x10xf32>, vector<10x16xf32>, vector<16x16xf32> -> vector<16x16xf32>
    %cst_64 = arith.constant dense<0.000000e+00> : vector<16x32xf32>
    %222 = tpu.matmul %221, %7, %cst_64 {dimension_numbers = #tpu.dot_dimension_numbers<[1], [0], [0], [1], [0, 0, 1, 1], [], []>} : vector<16x16xf32>, vector<16x32xf32>, vector<16x32xf32> -> vector<16x32xf32>
    %c0_65 = arith.constant 0 : index
    %c6 = arith.constant 6 : index
    %c0_66 = arith.constant 0 : index
    %c0_67 = arith.constant 0 : index
    %223 = vector.load %arg10[%c0_65, %c6, %c0_66, %c0_67] : memref<1x8x16x32xf32, #tpu.memory_space<vmem>>, vector<1x1x16x32xf32>
    %224 = vector.shape_cast %223 : vector<1x1x16x32xf32> to vector<16x32xf32>
    %225 = vector.shape_cast %222 : vector<16x32xf32> to vector<1x1x16x32xf32>
    tpu.vector_store %arg10[%c0_65, %c6, %c0_66, %c0_67], %225 {strides = array<i32>} : memref<1x8x16x32xf32, #tpu.memory_space<vmem>>, vector<1x1x16x32xf32>,
    %226 = vector.extract_strided_slice %8 {offsets = [7, 0], sizes = [1, 1], strides = [1, 1]} : vector<8x4xf32> to vector<1x1xf32>
    %227 = vector.broadcast %226 : vector<1x1xf32> to vector<10x16xf32>
    %228 = arith.mulf %14, %227 : vector<10x16xf32>
    %229 = vector.extract_strided_slice %8 {offsets = [7, 1], sizes = [1, 1], strides = [1, 1]} : vector<8x4xf32> to vector<1x1xf32>
    %230 = vector.broadcast %229 : vector<1x1xf32> to vector<10x16xf32>
    %231 = arith.mulf %19, %230 : vector<10x16xf32>
    %232 = arith.addf %228, %231 : vector<10x16xf32>
    %233 = vector.extract_strided_slice %8 {offsets = [7, 2], sizes = [1, 1], strides = [1, 1]} : vector<8x4xf32> to vector<1x1xf32>
    %234 = vector.broadcast %233 : vector<1x1xf32> to vector<10x16xf32>
    %235 = arith.mulf %24, %234 : vector<10x16xf32>
    %236 = arith.addf %232, %235 : vector<10x16xf32>
    %237 = vector.extract_strided_slice %8 {offsets = [7, 3], sizes = [1, 1], strides = [1, 1]} : vector<8x4xf32> to vector<1x1xf32>
    %238 = vector.broadcast %237 : vector<1x1xf32> to vector<10x16xf32>
    %239 = arith.mulf %29, %238 : vector<10x16xf32>
    %240 = arith.addf %236, %239 : vector<10x16xf32>
    %241 = vector.extract_strided_slice %9 {offsets = [7, 0], sizes = [1, 1], strides = [1, 1]} : vector<8x1xf32> to vector<1x1xf32>
    %242 = vector.broadcast %241 : vector<1x1xf32> to vector<10x16xf32>
    %243 = arith.addf %240, %242 : vector<10x16xf32>
    %cst_68 = arith.constant 0.000000e+00 : f32
    %244 = vector.broadcast %cst_68 : f32 to vector<10x16xf32>
    %245 = arith.cmpf ogt, %243, %244 : vector<10x16xf32>
    %cst_69 = arith.constant 1.000000e-01 : f32
    %246 = vector.broadcast %cst_69 : f32 to vector<10x16xf32>
    %247 = arith.mulf %246, %243 : vector<10x16xf32>
    %248 = arith.select %245, %243, %247 : vector<10x16xi1>, vector<10x16xf32>
    %cst_70 = arith.constant dense<0.000000e+00> : vector<16x16xf32>
    %249 = tpu.matmul %6, %248, %cst_70 {dimension_numbers = #tpu.dot_dimension_numbers<[1], [0], [0], [1], [0, 0, 1, 1], [], []>} : vector<16x10xf32>, vector<10x16xf32>, vector<16x16xf32> -> vector<16x16xf32>
    %cst_71 = arith.constant dense<0.000000e+00> : vector<16x32xf32>
    %250 = tpu.matmul %249, %7, %cst_71 {dimension_numbers = #tpu.dot_dimension_numbers<[1], [0], [0], [1], [0, 0, 1, 1], [], []>} : vector<16x16xf32>, vector<16x32xf32>, vector<16x32xf32> -> vector<16x32xf32>
    %c0_72 = arith.constant 0 : index
    %c7 = arith.constant 7 : index
    %c0_73 = arith.constant 0 : index
    %c0_74 = arith.constant 0 : index
    %251 = vector.load %arg10[%c0_72, %c7, %c0_73, %c0_74] : memref<1x8x16x32xf32, #tpu.memory_space<vmem>>, vector<1x1x16x32xf32>
    %252 = vector.shape_cast %251 : vector<1x1x16x32xf32> to vector<16x32xf32>
    %253 = vector.shape_cast %250 : vector<16x32xf32> to vector<1x1x16x32xf32>
    tpu.vector_store %arg10[%c0_72, %c7, %c0_73, %c0_74], %253 {strides = array<i32>} : memref<1x8x16x32xf32, #tpu.memory_space<vmem>>, vector<1x1x16x32xf32>,
    return
  }
  func.func @transform_0(%arg0: i32, %arg1: i32) -> (i32, i32, i32, i32) {
    %c0_i32 = arith.constant 0 : i32
    %c0_i32_0 = arith.constant 0 : i32
    %c0_i32_1 = arith.constant 0 : i32
    return %arg0, %c0_i32, %arg1, %c0_i32_0 : i32, i32, i32, i32
  }
  func.func @transform_1(%arg0: i32, %arg1: i32) -> (i32, i32, i32, i32) {
    %c0_i32 = arith.constant 0 : i32
    %c0_i32_0 = arith.constant 0 : i32
    %c0_i32_1 = arith.constant 0 : i32
    return %arg0, %arg1, %c0_i32, %c0_i32_0 : i32, i32, i32, i32
  }
  func.func @transform_2(%arg0: i32, %arg1: i32) -> (i32, i32, i32, i32) {
    %c0_i32 = arith.constant 0 : i32
    %c0_i32_0 = arith.constant 0 : i32
    %c0_i32_1 = arith.constant 0 : i32
    return %arg0, %arg1, %c0_i32, %c0_i32_0 : i32, i32, i32, i32
  }
  func.func @transform_3(%arg0: i32, %arg1: i32) -> (i32, i32) {
    %c0_i32 = arith.constant 0 : i32
    %c0_i32_0 = arith.constant 0 : i32
    %c0_i32_1 = arith.constant 0 : i32
    return %c0_i32, %c0_i32_0 : i32, i32
  }
  func.func @transform_4(%arg0: i32, %arg1: i32) -> (i32, i32) {
    %c0_i32 = arith.constant 0 : i32
    %c0_i32_0 = arith.constant 0 : i32
    %c0_i32_1 = arith.constant 0 : i32
    return %c0_i32, %c0_i32_0 : i32, i32
  }
  func.func @transform_5(%arg0: i32, %arg1: i32) -> (i32, i32) {
    %c0_i32 = arith.constant 0 : i32
    %c0_i32_0 = arith.constant 0 : i32
    %c0_i32_1 = arith.constant 0 : i32
    return %c0_i32, %c0_i32_0 : i32, i32
  }
  func.func @transform_6(%arg0: i32, %arg1: i32) -> (i32, i32) {
    %c0_i32 = arith.constant 0 : i32
    %c0_i32_0 = arith.constant 0 : i32
    %c0_i32_1 = arith.constant 0 : i32
    return %c0_i32, %c0_i32_0 : i32, i32
  }
  func.func @transform_8(%arg0: i32, %arg1: i32) -> (i32, i32, i32, i32) {
    %c0_i32 = arith.constant 0 : i32
    %c0_i32_0 = arith.constant 0 : i32
    %c0_i32_1 = arith.constant 0 : i32
    return %arg0, %c0_i32, %arg1, %c0_i32_0 : i32, i32, i32, i32
  }
}

</mosaic_0001>

<llo_original>
// kernel: tpu_custom_call.1
$region0: #{tpu_custom_call.1}
  #allocation0 [shape = 'u32[]', space=smem, size = 0x4, offset = 0x4, fixed_abs, tag = 'smem constant byte address 0x4 - core index']
  #allocation1 [shape = 'u32[144,128]{1,0:T(1,128)}', space=vmem, size = 0x12000, scoped, tag = 'internal scratch']
  #allocation5 [shape = 's32[]', space=sflag, size = 0x4, offset = 0, fixed_abs, tag = 'sflag constant byte address 0x0 - dummy sync flag']
  %s0 = inlined_call_operand.vmem [shape: f32[2,4,16,16], index: 0, kind: input, shape index: {}]
  %s1 = inlined_call_operand.vmem [shape: f32[2,2,4,16], index: 1, kind: input, shape index: {}]
  %s2 = inlined_call_operand.vmem [shape: f32[2,2,4,16], index: 2, kind: input, shape index: {}]
  %s3 = inlined_call_operand.vmem [shape: f32[16,10], index: 3, kind: input, shape index: {}]
  %s4 = inlined_call_operand.vmem [shape: f32[16,32], index: 4, kind: input, shape index: {}]
  %s5 = inlined_call_operand.vmem [shape: f32[8,4], index: 5, kind: input, shape index: {}]
  %s6 = inlined_call_operand.vmem [shape: f32[8,1], index: 6, kind: input, shape index: {}]
  %s7 = inlined_call_operand.hbm [shape: f32[2,11,32,32], index: 7, kind: input, shape index: {}, may-alias: {7,8}]
  %s8 = inlined_call_operand.hbm [shape: f32[2,11,32,32], index: 8, kind: output, shape index: {}, may-alias: {7,8}]
  %s9 = sld [smem:[#allocation0]]
  $region99: #{tpu_custom_call.1} parent=0
    _
  %s11 = ssub.s32 1, %s9
  %s12 = scalar_select 0, %s11, %s9
  $region1: #{tpu_custom_call.1} parent=0
    #allocation2 [shape = 'u8[32768]{0}', space=vmem, size = 0x8000, scoped, tag = 'input window, operand 0']
    #allocation3 [shape = 'u8[131072]{0}', space=vmem, size = 0x20000, scoped, tag = 'output window, operand 0']
    #allocation4 [shape = 's32[2]{0}', space=sflag, size = 0x8, scoped, tag = 'scoped memory for tpu_custom_call.1']
    %13 = vsyncpa [#allocation4], 0
    %s14 = scalar_lea.sflag [#allocation4], 1
    %15 = vsyncpa %s14, 0
    loop: start=0, step=1, limit=6
    $region2: #{tpu_custom_call.1} parent=1 // loop_pre_header
      _
    $region3: #{tpu_custom_call.1} parent=1 // loop_header
      %s17 = sphi 0, %s21
      %p18 = scmp.ge.s32.totalorder %s17, 6
      %s24 = sphi 0, %s36
      %s25 = sphi 0, %s32
      %s26 = sphi 0, %s24
      %s27 = sphi 0, %s25
      %s28 = sphi 0, %s26
      %s29 = sphi 0, %s27
      %s41 = sphi 0, %s43
      %s44 = sphi 0, %s41
      %s45 = sphi 0, %s44
      %s61 = sphi 0, %s45
      %s69 = sphi 0, %s71
      %s72 = sphi 0, %s69
      %s73 = sphi 0, %s72
      %s89 = sphi 0, %s73
      %s97 = sphi 0, %s99
      %s100 = sphi 0, %s97
      %s101 = sphi 0, %s100
      %s117 = sphi 0, %s101
      %s121 = sphi 0, %s121
      %s123 = sphi 0, %s121
      %s124 = sphi 0, %s123
      %s138 = sphi 0, %s124
      %s142 = sphi 0, %s142
      %s144 = sphi 0, %s142
      %s145 = sphi 0, %s144
      %s159 = sphi 0, %s145
      %s163 = sphi 0, %s163
      %s165 = sphi 0, %s163
      %s166 = sphi 0, %s165
      %s180 = sphi 0, %s166
      %s184 = sphi 0, %s184
      %s186 = sphi 0, %s184
      %s187 = sphi 0, %s186
      %s201 = sphi 0, %s187
      %s209 = sphi 0, %s211
      %s212 = sphi 0, %s209
      %s213 = sphi 0, %s212
      %s229 = sphi 0, %s213
    $region4: #{tpu_custom_call.1} parent=1 // loop_header_branch
      %20 = sbr.rel (%p18) target = $region8
    $region5: #{tpu_custom_call.1} parent=1 // loop_body
      %s22 = ssub.s32 %s17, 1
      %s23 = ssub.s32 %s17, 2
      %s30 = sadd.s32 1, %s25
      %p31 = scmp.ge.s32.totalorder %s30, 2
      %s32 = scalar_select %p31, 0, %s30
      %s33 = sadd.s32 1, %s24
      %s34 = scalar_select %p31, %s33, %s24
      %p35 = scmp.ge.s32.totalorder %s34, 2
      %s36 = scalar_select %p35, 0, %s34
      %s37 = ssub.s32 %s24, %s36
      %s38 = ssub.s32 %s25, %s32
      %s39 = sor.u32 %s37, %s38
      %p40 = scmp.eq.s32.totalorder %s39, 0
      %s42 = sadd.s32 %s41, 1
      %s43 = scalar_select %p40, %s41, %s42
      %p46 = pneg %p40
      %p47 = scmp.eq.s32.totalorder %s17, 3
      %p48 = por %p46, %p47
      %p49 = scmp.ne.s32.totalorder %s41, %s44
      %p50 = scmp.eq.s32.totalorder %s17, 0
      %p51 = por %p49, %p50
      %p52 = scmp.ne.s32.totalorder %s41, %s44
      %p53 = scmp.eq.s32.totalorder %s22, 3
      %p54 = por %p52, %p53
      %p55 = scmp.ne.s32.totalorder %s44, %s45
      %p56 = scmp.eq.s32.totalorder %s22, 0
      %p57 = por %p55, %p56
      %p58 = scmp.ne.s32.totalorder %s44, %s45
      %p59 = scmp.eq.s32.totalorder %s23, 3
      %p60 = por %p58, %p59
      %p62 = scmp.ne.s32.totalorder %s45, %s61
      %p63 = scmp.eq.s32.totalorder %s23, 0
      %p64 = por %p62, %p63
      %s65 = ssub.s32 %s24, %s36
      %s66 = ssub.s32 %s25, %s32
      %s67 = sor.u32 %s65, %s66
      %p68 = scmp.eq.s32.totalorder %s67, 0
      %s70 = sadd.s32 %s69, 1
      %s71 = scalar_select %p68, %s69, %s70
      %p74 = pneg %p68
      %p75 = scmp.eq.s32.totalorder %s17, 3
      %p76 = por %p74, %p75
      %p77 = scmp.ne.s32.totalorder %s69, %s72
      %p78 = scmp.eq.s32.totalorder %s17, 0
      %p79 = por %p77, %p78
      %p80 = scmp.ne.s32.totalorder %s69, %s72
      %p81 = scmp.eq.s32.totalorder %s22, 3
      %p82 = por %p80, %p81
      %p83 = scmp.ne.s32.totalorder %s72, %s73
      %p84 = scmp.eq.s32.totalorder %s22, 0
      %p85 = por %p83, %p84
      %p86 = scmp.ne.s32.totalorder %s72, %s73
      %p87 = scmp.eq.s32.totalorder %s23, 3
      %p88 = por %p86, %p87
      %p90 = scmp.ne.s32.totalorder %s73, %s89
      %p91 = scmp.eq.s32.totalorder %s23, 0
      %p92 = por %p90, %p91
      %s93 = ssub.s32 %s24, %s36
      %s94 = ssub.s32 %s25, %s32
      %s95 = sor.u32 %s93, %s94
      %p96 = scmp.eq.s32.totalorder %s95, 0
      %s98 = sadd.s32 %s97, 1
      %s99 = scalar_select %p96, %s97, %s98
      %p102 = pneg %p96
      %p103 = scmp.eq.s32.totalorder %s17, 3
      %p104 = por %p102, %p103
      %p105 = scmp.ne.s32.totalorder %s97, %s100
      %p106 = scmp.eq.s32.totalorder %s17, 0
      %p107 = por %p105, %p106
      %p108 = scmp.ne.s32.totalorder %s97, %s100
      %p109 = scmp.eq.s32.totalorder %s22, 3
      %p110 = por %p108, %p109
      %p111 = scmp.ne.s32.totalorder %s100, %s101
      %p112 = scmp.eq.s32.totalorder %s22, 0
      %p113 = por %p111, %p112
      %p114 = scmp.ne.s32.totalorder %s100, %s101
      %p115 = scmp.eq.s32.totalorder %s23, 3
      %p116 = por %p114, %p115
      %p118 = scmp.ne.s32.totalorder %s101, %s117
      %p119 = scmp.eq.s32.totalorder %s23, 0
      %p120 = por %p118, %p119
      %s122 = sadd.s32 %s121, 1
      %p125 = scmp.eq.s32.totalorder %s17, 3
      %p126 = scmp.ne.s32.totalorder %s121, %s123
      %p127 = scmp.eq.s32.totalorder %s17, 0
      %p128 = por %p126, %p127
      %p129 = scmp.ne.s32.totalorder %s121, %s123
      %p130 = scmp.eq.s32.totalorder %s22, 3
      %p131 = por %p129, %p130
      %p132 = scmp.ne.s32.totalorder %s123, %s124
      %p133 = scmp.eq.s32.totalorder %s22, 0
      %p134 = por %p132, %p133
      %p135 = scmp.ne.s32.totalorder %s123, %s124
      %p136 = scmp.eq.s32.totalorder %s23, 3
      %p137 = por %p135, %p136
      %p139 = scmp.ne.s32.totalorder %s124, %s138
      %p140 = scmp.eq.s32.totalorder %s23, 0
      %p141 = por %p139, %p140
      %s143 = sadd.s32 %s142, 1
      %p146 = scmp.eq.s32.totalorder %s17, 3
      %p147 = scmp.ne.s32.totalorder %s142, %s144
      %p148 = scmp.eq.s32.totalorder %s17, 0
      %p149 = por %p147, %p148
      %p150 = scmp.ne.s32.totalorder %s142, %s144
      %p151 = scmp.eq.s32.totalorder %s22, 3
      %p152 = por %p150, %p151
      %p153 = scmp.ne.s32.totalorder %s144, %s145
      %p154 = scmp.eq.s32.totalorder %s22, 0
      %p155 = por %p153, %p154
      %p156 = scmp.ne.s32.totalorder %s144, %s145
      %p157 = scmp.eq.s32.totalorder %s23, 3
      %p158 = por %p156, %p157
      %p160 = scmp.ne.s32.totalorder %s145, %s159
      %p161 = scmp.eq.s32.totalorder %s23, 0
      %p162 = por %p160, %p161
      %s164 = sadd.s32 %s163, 1
      %p167 = scmp.eq.s32.totalorder %s17, 3
      %p168 = scmp.ne.s32.totalorder %s163, %s165
      %p169 = scmp.eq.s32.totalorder %s17, 0
      %p170 = por %p168, %p169
      %p171 = scmp.ne.s32.totalorder %s163, %s165
      %p172 = scmp.eq.s32.totalorder %s22, 3
      %p173 = por %p171, %p172
      %p174 = scmp.ne.s32.totalorder %s165, %s166
      %p175 = scmp.eq.s32.totalorder %s22, 0
      %p176 = por %p174, %p175
      %p177 = scmp.ne.s32.totalorder %s165, %s166
      %p178 = scmp.eq.s32.totalorder %s23, 3
      %p179 = por %p177, %p178
      %p181 = scmp.ne.s32.totalorder %s166, %s180
      %p182 = scmp.eq.s32.totalorder %s23, 0
      %p183 = por %p181, %p182
      %s185 = sadd.s32 %s184, 1
      %p188 = scmp.eq.s32.totalorder %s17, 3
      %p189 = scmp.ne.s32.totalorder %s184, %s186
      %p190 = scmp.eq.s32.totalorder %s17, 0
      %p191 = por %p189, %p190
      %p192 = scmp.ne.s32.totalorder %s184, %s186
      %p193 = scmp.eq.s32.totalorder %s22, 3
      %p194 = por %p192, %p193
      %p195 = scmp.ne.s32.totalorder %s186, %s187
      %p196 = scmp.eq.s32.totalorder %s22, 0
      %p197 = por %p195, %p196
      %p198 = scmp.ne.s32.totalorder %s186, %s187
      %p199 = scmp.eq.s32.totalorder %s23, 3
      %p200 = por %p198, %p199
      %p202 = scmp.ne.s32.totalorder %s187, %s201
      %p203 = scmp.eq.s32.totalorder %s23, 0
      %p204 = por %p202, %p203
      %s205 = ssub.s32 %s24, %s36
      %s206 = ssub.s32 %s25, %s32
      %s207 = sor.u32 %s205, %s206
      %p208 = scmp.eq.s32.totalorder %s207, 0
      %s210 = sadd.s32 %s209, 1
      %s211 = scalar_select %p208, %s209, %s210
      %p214 = pneg %p208
      %p215 = scmp.eq.s32.totalorder %s17, 3
      %p216 = por %p214, %p215
      %p217 = scmp.ne.s32.totalorder %s209, %s212
      %p218 = scmp.eq.s32.totalorder %s17, 0
      %p219 = por %p217, %p218
      %p220 = scmp.ne.s32.totalorder %s209, %s212
      %p221 = scmp.eq.s32.totalorder %s22, 3
      %p222 = por %p220, %p221
      %p223 = scmp.ne.s32.totalorder %s212, %s213
      %p224 = scmp.eq.s32.totalorder %s22, 0
      %p225 = por %p223, %p224
      %p226 = scmp.ne.s32.totalorder %s212, %s213
      %p227 = scmp.eq.s32.totalorder %s23, 3
      %p228 = por %p226, %p227
      %p230 = scmp.ne.s32.totalorder %s213, %s229
      %p231 = scmp.eq.s32.totalorder %s23, 0
      %p232 = por %p230, %p231
      %p233 = scmp.le.s32.totalorder 1, %s17
      %p234 = scmp.lt.s32.totalorder %s17, 5
      %p235 = pnand %p233, %p234
      %p236 = pneg %p235
      // Predicated region
      $region9: #{tpu_custom_call.1} parent=5 // pred_check
        _
      $region10: #{tpu_custom_call.1} parent=5 // pred_check_branch
        %238 = sbr.rel (%p235) target = $region12
      $region11: #{tpu_custom_call.1} parent=5 // pred_region
        %s239 = ssub.s32 %s17, 1
        // Predicated region
        $region13: #{tpu_custom_call.1} parent=11 // pred_check
          %p240 = pneg %p134
        $region14: #{tpu_custom_call.1} parent=11 // pred_check_branch
          %242 = sbr.rel (%p240) target = $region16
        $region15: #{tpu_custom_call.1} parent=11 // pred_region
          _
        $region16: #{tpu_custom_call.1} parent=11 // pred_fallthru
          _
        // Predicated region
        $region17: #{tpu_custom_call.1} parent=11 // pred_check
          %p243 = pneg %p155
        $region18: #{tpu_custom_call.1} parent=11 // pred_check_branch
          %245 = sbr.rel (%p243) target = $region20
        $region19: #{tpu_custom_call.1} parent=11 // pred_region
          _
        $region20: #{tpu_custom_call.1} parent=11 // pred_fallthru
          _
        // Predicated region
        $region21: #{tpu_custom_call.1} parent=11 // pred_check
          %p246 = pneg %p176
        $region22: #{tpu_custom_call.1} parent=11 // pred_check_branch
          %248 = sbr.rel (%p246) target = $region24
        $region23: #{tpu_custom_call.1} parent=11 // pred_region
          _
        $region24: #{tpu_custom_call.1} parent=11 // pred_fallthru
          _
        // Predicated region
        $region25: #{tpu_custom_call.1} parent=11 // pred_check
          %p249 = pneg %p197
        $region26: #{tpu_custom_call.1} parent=11 // pred_check_branch
          %251 = sbr.rel (%p249) target = $region28
        $region27: #{tpu_custom_call.1} parent=11 // pred_region
          _
        $region28: #{tpu_custom_call.1} parent=11 // pred_fallthru
          _
      $region12: #{tpu_custom_call.1} parent=5 // pred_fallthru
        _
      %p252 = scmp.lt.s32.totalorder %s17, 4
      // Predicated region
      $region29: #{tpu_custom_call.1} parent=5 // pred_check
        %p253 = pneg %p252
      $region30: #{tpu_custom_call.1} parent=5 // pred_check_branch
        %255 = sbr.rel (%p253) target = $region32
      $region31: #{tpu_custom_call.1} parent=5 // pred_region
        // Predicated region
        $region33: #{tpu_custom_call.1} parent=31 // pred_check
          %p256 = pneg %p51
        $region34: #{tpu_custom_call.1} parent=31 // pred_check_branch
          %258 = sbr.rel (%p256) target = $region36
        $region35: #{tpu_custom_call.1} parent=31 // pred_region
          %s259 = sand.u32 %s41, 1
          %s260 = sand.u32 %s41, 1
          %s261 = smul.addr %s260, 32
          %s262 = scalar_lea.vmem [#allocation2], %s261
          %s263 = smul.addr %s24, 8
          %s264 = sadd.s32 %s25, %s263
          %s265 = smul.addr %s264, 8
          %s266 = scalar_lea.vmem %s0, %s265
          // Predicated region
          $region37: #{tpu_custom_call.1} parent=35 // pred_check
            _
          $region38: #{tpu_custom_call.1} parent=35 // pred_check_branch
            %268 = sbr.rel (0) target = $region40
          $region39: #{tpu_custom_call.1} parent=35 // pred_region
            // Predicated region
            $region41: #{tpu_custom_call.1} parent=39 // pred_check
              _
            $region42: #{tpu_custom_call.1} parent=39 // pred_check_branch
              %270 = sbr.rel (0) target = $region44
            $region43: #{tpu_custom_call.1} parent=39 // pred_region
              // Predicated region
              $region56: #{tpu_custom_call.1} parent=43 // pred_check
                _
              $region57: #{tpu_custom_call.1} parent=43 // pred_check_branch
                %291 = sbr.rel (0) target = $region59
              $region58: #{tpu_custom_call.1} parent=43 // pred_region
                loop: start=0, step=1, limit=1
                $region60: #{tpu_custom_call.1} parent=58 // loop_pre_header
                  _
                $region61: #{tpu_custom_call.1} parent=58 // loop_header
                  %s293 = sphi 0, %s297
                  %p294 = scmp.ge.s32.totalorder %s293, 1
                  %s298 = sphi %s266, %s266
                  %s299 = sphi %s262, %s262
                $region62: #{tpu_custom_call.1} parent=58 // loop_header_branch
                  %296 = sbr.rel (%p294) target = $region66
                $region63: #{tpu_custom_call.1} parent=58 // loop_body
                  %v300 = vld [vmem:[%s298] sm:$0xff]
                  %301 = vst [vmem:[%s299] sm:$0xff] %v300
                  %v302 = vld [vmem:[%s298 + $0x10] sm:$0xff]
                  %303 = vst [vmem:[%s299 + $0x8] sm:$0xff] %v302
                  %v304 = vld [vmem:[%s298 + $0x20] sm:$0xff]
                  %305 = vst [vmem:[%s299 + $0x10] sm:$0xff] %v304
                  %v306 = vld [vmem:[%s298 + $0x30] sm:$0xff]
                  %307 = vst [vmem:[%s299 + $0x18] sm:$0xff] %v306
                $region64: #{tpu_custom_call.1} parent=58 // loop_footer
                  %s297 = sadd.s32 1, %s293
                $region65: #{tpu_custom_call.1} parent=58 // loop_footer_branch
                  %292 = sbr.rel target = $region61
                $region66: #{tpu_custom_call.1} parent=58 // loop_exit
                  _
              $region59: #{tpu_custom_call.1} parent=43 // pred_fallthru
                _
              // Predicated region
              $region67: #{tpu_custom_call.1} parent=43 // pred_check
                _
              $region68: #{tpu_custom_call.1} parent=43 // pred_check_branch
                %309 = sbr.rel target = $region70
              $region69: #{tpu_custom_call.1} parent=43 // pred_region
                _
              $region70: #{tpu_custom_call.1} parent=43 // pred_fallthru
                _
            $region44: #{tpu_custom_call.1} parent=39 // pred_fallthru
              _
            // Predicated region
            $region45: #{tpu_custom_call.1} parent=39 // pred_check
              _
            $region46: #{tpu_custom_call.1} parent=39 // pred_check_branch
              %272 = sbr.rel target = $region48
            $region47: #{tpu_custom_call.1} parent=39 // pred_region
              loop: start=0, step=1, limit=1
              $region49: #{tpu_custom_call.1} parent=47 // loop_pre_header
                _
              $region50: #{tpu_custom_call.1} parent=47 // loop_header
                %s275 = sphi 0, %s279
                %p276 = scmp.ge.s32.totalorder %s275, 1
                %s280 = sphi %s266, %s266
                %s281 = sphi %s262, %s262
              $region51: #{tpu_custom_call.1} parent=47 // loop_header_branch
                %278 = sbr.rel (%p276) target = $region55
              $region52: #{tpu_custom_call.1} parent=47 // loop_body
                %v282 = vld [vmem:[%s280] sm:$0xff]
                %283 = vst [vmem:[%s281] sm:$0xff] %v282
                %v284 = vld [vmem:[%s280 + $0x10] sm:$0xff]
                %285 = vst [vmem:[%s281 + $0x8] sm:$0xff] %v284
                %v286 = vld [vmem:[%s280 + $0x20] sm:$0xff]
                %287 = vst [vmem:[%s281 + $0x10] sm:$0xff] %v286
                %v288 = vld [vmem:[%s280 + $0x30] sm:$0xff]
                %289 = vst [vmem:[%s281 + $0x18] sm:$0xff] %v288
              $region53: #{tpu_custom_call.1} parent=47 // loop_footer
                %s279 = sadd.s32 1, %s275
              $region54: #{tpu_custom_call.1} parent=47 // loop_footer_branch
                %274 = sbr.rel target = $region50
              $region55: #{tpu_custom_call.1} parent=47 // loop_exit
                _
            $region48: #{tpu_custom_call.1} parent=39 // pred_fallthru
              _
          $region40: #{tpu_custom_call.1} parent=35 // pred_fallthru
            _
          %310 = vnop
        $region36: #{tpu_custom_call.1} parent=31 // pred_fallthru
          _
        // Predicated region
        $region71: #{tpu_custom_call.1} parent=31 // pred_check
          %p311 = pneg %p79
        $region72: #{tpu_custom_call.1} parent=31 // pred_check_branch
          %313 = sbr.rel (%p311) target = $region74
        $region73: #{tpu_custom_call.1} parent=31 // pred_region
          %p314 = scmp.lt.s32.totalorder %s24, 1
          %s315 = scalar_select %p314, %s24, 1
          %p316 = scmp.lt.s32.totalorder %s25, 1
          %s317 = scalar_select %p316, %s25, 1
          %s318 = smul.addr %s315, 2
          %s319 = sadd.s32 %s317, %s318
          %s320 = smul.addr %s319, 4
          %s321 = scalar_lea.vmem %s1, %s320
        $region74: #{tpu_custom_call.1} parent=31 // pred_fallthru
          _
        // Predicated region
        $region75: #{tpu_custom_call.1} parent=31 // pred_check
          %p322 = pneg %p107
        $region76: #{tpu_custom_call.1} parent=31 // pred_check_branch
          %324 = sbr.rel (%p322) target = $region78
        $region77: #{tpu_custom_call.1} parent=31 // pred_region
          %p325 = scmp.lt.s32.totalorder %s24, 1
          %s326 = scalar_select %p325, %s24, 1
          %p327 = scmp.lt.s32.totalorder %s25, 1
          %s328 = scalar_select %p327, %s25, 1
          %s329 = smul.addr %s326, 2
          %s330 = sadd.s32 %s328, %s329
          %s331 = smul.addr %s330, 4
          %s332 = scalar_lea.vmem %s2, %s331
        $region78: #{tpu_custom_call.1} parent=31 // pred_fallthru
          _
      $region32: #{tpu_custom_call.1} parent=5 // pred_fallthru
        _
      %p333 = scmp.le.s32.totalorder 1, %s17
      %p334 = scmp.lt.s32.totalorder %s17, 5
      %p335 = pnand %p333, %p334
      %p336 = pneg %p335
      // Predicated region
      $region79: #{tpu_custom_call.1} parent=5 // pred_check
        _
      $region80: #{tpu_custom_call.1} parent=5 // pred_check_branch
        %338 = sbr.rel (%p335) target = $region82
      $region81: #{tpu_custom_call.1} parent=5 // pred_region
        %s339 = ssub.s32 %s17, 1
        %s340 = sand.u32 %s44, 1
        %s341 = sand.u32 %s44, 1
        %s342 = smul.addr %s341, 32
        %s343 = scalar_lea.vmem [#allocation2], %s342
        // Predicated region
        $region83: #{tpu_custom_call.1} parent=81 // pred_check
          %p344 = pneg %p57
        $region84: #{tpu_custom_call.1} parent=81 // pred_check_branch
          %346 = sbr.rel (%p344) target = $region86
        $region85: #{tpu_custom_call.1} parent=81 // pred_region
          _
        $region86: #{tpu_custom_call.1} parent=81 // pred_fallthru
          _
        %s347 = sand.u32 %s44, 1
        %s348 = sand.u32 %s44, 1
        %s349 = smul.addr %s348, 32
        %s350 = scalar_lea.vmem [#allocation2], %s349
        %p351 = pneg %p57
        %p352 = pneg %p54
        %p353 = scmp.lt.s32.totalorder %s26, 1
        %s354 = scalar_select %p353, %s26, 1
        %p355 = scmp.lt.s32.totalorder %s27, 1
        %s356 = scalar_select %p355, %s27, 1
        %s357 = smul.addr %s354, 2
        %s358 = sadd.s32 %s356, %s357
        %s359 = smul.addr %s358, 4
        %s360 = scalar_lea.vmem %s1, %s359
        %p361 = pneg %p85
        %p362 = pneg %p82
        %p363 = scmp.lt.s32.totalorder %s26, 1
        %s364 = scalar_select %p363, %s26, 1
        %p365 = scmp.lt.s32.totalorder %s27, 1
        %s366 = scalar_select %p365, %s27, 1
        %s367 = smul.addr %s364, 2
        %s368 = sadd.s32 %s366, %s367
        %s369 = smul.addr %s368, 4
        %s370 = scalar_lea.vmem %s2, %s369
        %p371 = pneg %p113
        %p372 = pneg %p110
        %p373 = pneg %p134
        %p374 = pneg %p131
        %p375 = pneg %p155
        %p376 = pneg %p152
        %p377 = pneg %p176
        %p378 = pneg %p173
        %p379 = pneg %p197
        %p380 = pneg %p194
        %p381 = pneg %p225
        %p382 = pneg %p222
        %s383 = sand.u32 %s212, 1
        %s384 = scalar_lea.sflag [#allocation4], %s383
        %s385 = sand.u32 %s212, 1
        %s386 = smul.addr %s385, 128
        %s387 = scalar_lea.vmem [#allocation3], %s386
        %p388 = scmp.lt.s32.totalorder %s26, 1
        %s389 = scalar_select %p388, %s26, 1
        %p390 = scmp.lt.s32.totalorder %s27, 1
        %s391 = scalar_select %p390, %s27, 1
        %s392 = smul.addr %s389, 2
        %s393 = sadd.s32 %s391, %s392
        %s394 = smul.addr %s393, 4
        %s395 = scalar_lea.vmem %s1, %s394
        %p396 = scmp.lt.s32.totalorder %s26, 1
        %s397 = scalar_select %p396, %s26, 1
        %p398 = scmp.lt.s32.totalorder %s27, 1
        %s399 = scalar_select %p398, %s27, 1
        %s400 = smul.addr %s397, 2
        %s401 = sadd.s32 %s399, %s400
        %s402 = smul.addr %s401, 4
        %s403 = scalar_lea.vmem %s2, %s402
        %s404 = smul.u32 2, %s27
        %v405 = vld [vmem:[%s343] sm:$0xff]
        %v406 = vld [vmem:[%s343 + $0x8] sm:$0xff]
        %v407 = vld [vmem:[%s343 + $0x10] sm:$0xff]
        %v408 = vld [vmem:[%s343 + $0x18] sm:$0xff]
        %v409 = vld [vmem:[%s395] sm:$0xf]
        %v410 = vld [vmem:[%s403] sm:$0xf]
        %v411 = vld [vmem:[%s3] sm:$0xff]
        %v412 = vld [vmem:[%s3 + $0x8] sm:$0xff]
        %v413 = vld [vmem:[%s4] sm:$0xff]
        %v414 = vld [vmem:[%s4 + $0x8] sm:$0xff]
        %v415 = vld [vmem:[%s5] sm:$0xff]
        %v416 = vld [vmem:[%s6] sm:$0xff]
        %v418 = vrot.slane %v405, 7
        %v421 = vrot.slane %v410, 7
        %vm423 = vcmask 1040384
        %v424 = vsel %vm423, %v409, %v418
        %v425 = vsel %vm423, %v418, %v421
        %v427 = vrot.slane %v409, 1
        %v430 = vrot.slane %v406, 7
        %v432 = vsel %vm423, %v427, %v430
        %v433 = vsel %vm423, %v430, %v410
        %v434 = vrot.slane %v409, 2
        %v437 = vrot.slane %v407, 7
        %v439 = vrot.slane %v410, 1
        %v441 = vsel %vm423, %v434, %v437
        %v442 = vsel %vm423, %v437, %v439
        %v443 = vrot.slane %v409, 3
        %v446 = vrot.slane %v408, 7
        %v448 = vrot.slane %v410, 2
        %v450 = vsel %vm423, %v443, %v446
        %v451 = vsel %vm423, %v446, %v448
        %s453 = vtos %v415
        %v454 = vstv %s453
        %v456 = vmul.f32 %v424, %v454
        %v457 = vmul.f32 %v425, %v454
        %458 = vrot.lane.b32.xlu0 %v415, 127
        %v459 = vpop.permute.xlu0 %458
        %s460 = vtos %v459
        %v461 = vstv %s460
        %v463 = vmul.f32 %v432, %v461
        %v464 = vmul.f32 %v433, %v461
        %v465 = vadd.f32 %v456, %v463
        %v466 = vadd.f32 %v457, %v464
        %467 = vrot.lane.b32.xlu0 %v415, 126
        %v468 = vpop.permute.xlu0 %467
        %s469 = vtos %v468
        %v470 = vstv %s469
        %v472 = vmul.f32 %v441, %v470
        %v473 = vmul.f32 %v442, %v470
        %v474 = vadd.f32 %v465, %v472
        %v475 = vadd.f32 %v466, %v473
        %476 = vrot.lane.b32.xlu0 %v415, 125
        %v477 = vpop.permute.xlu0 %476
        %s478 = vtos %v477
        %v479 = vstv %s478
        %v481 = vmul.f32 %v450, %v479
        %v482 = vmul.f32 %v451, %v479
        %v483 = vadd.f32 %v474, %v481
        %v484 = vadd.f32 %v475, %v482
        %s486 = vtos %v416
        %v487 = vstv %s486
        %v489 = vadd.f32 %v483, %v487
        %v490 = vadd.f32 %v484, %v487
        %vm491 = vcmp.gt.f32.partialorder %v489, 0.0
        %vm492 = vcmp.gt.f32.partialorder %v490, 0.0
        %v493 = vmul.f32 %v489, 0.1
        %v494 = vmul.f32 %v490, 0.1
        %v495 = vsel %vm491, %v489, %v493
        %v496 = vsel %vm492, %v490, %v494
        %vm497 = vcmask 80896
        %v499 = vsel %vm497, %v411, 0
        %v502 = vsel %vm497, %v412, 0
        %vm504 = vcmask 1041408
        %v506 = vsel %vm504, %v496, 0
        %508 = vmatprep.subr.mxu0 0.0
        %509 = vmatpush1.msra.mxu0 %v495
        %510 = vmatprep.subr.mxu0 0.0
        %511 = vmatpush1.msra.mxu0 %v506
        %512 = vmatprep.subr.mxu0 0.0
        %513 = vmatpush1.msra.mxu0 0.0
        %514 = vmatprep.subr.mxu0 0.0
        %515 = vmatpush1.msra.mxu0 0.0
        %516 = vmatprep.subr.mxu0 0.0
        %517 = vmatpush1.msra.mxu0 0.0
        %518 = vmatprep.subr.mxu0 0.0
        %519 = vmatpush1.msra.mxu0 0.0
        %520 = vmatprep.subr.mxu0 0.0
        %521 = vmatpush1.msra.mxu0 0.0
        %522 = vmatprep.subr.mxu0 0.0
        %523 = vmatpush1.msra.mxu0 0.0
        %524 = vmatprep.subr.mxu0 0.0
        %525 = vmatpush1.msra.mxu0 0.0
        %526 = vmatprep.subr.mxu0 0.0
        %527 = vmatpush1.msra.mxu0 0.0
        %528 = vmatprep.subr.mxu0 0.0
        %529 = vmatpush1.msra.mxu0 0.0
        %530 = vmatprep.subr.mxu0 0.0
        %531 = vmatpush1.msra.mxu0 0.0
        %532 = vmatprep.subr.mxu0 0.0
        %533 = vmatpush1.msra.mxu0 0.0
        %534 = vmatprep.subr.mxu0 0.0
        %535 = vmatpush1.msra.mxu0 0.0
        %536 = vmatprep.subr.mxu0 0.0
        %537 = vmatpush1.msra.mxu0 0.0
        %538 = vmatprep.subr.mxu0 0.0
        %539 = vmatpush1.msra.mxu0 0.0
        %540 = vmatprep.subr.mxu0 0.0
        %541 = vmatpush1.msra.mxu0 0.0
        %542 = vmatprep.subr.mxu0 0.0
        %543 = vmatpush1.msra.mxu0 0.0
        %544 = vmatprep.subr.mxu0 0.0
        %545 = vmatpush1.msra.mxu0 0.0
        %546 = vmatprep.subr.mxu0 0.0
        %547 = vmatpush1.msra.mxu0 0.0
        %548 = vmatprep.subr.mxu0 0.0
        %549 = vmatpush1.msra.mxu0 0.0
        %550 = vmatprep.subr.mxu0 0.0
        %551 = vmatpush1.msra.mxu0 0.0
        %552 = vmatprep.subr.mxu0 0.0
        %553 = vmatpush1.msra.mxu0 0.0
        %554 = vmatprep.subr.mxu0 0.0
        %555 = vmatpush1.msra.mxu0 0.0
        %556 = vmatprep.subr.mxu0 0.0
        %557 = vmatpush1.msra.mxu0 0.0
        %558 = vmatprep.subr.mxu0 0.0
        %559 = vmatpush1.msra.mxu0 0.0
        %560 = vmatprep.subr.mxu0 0.0
        %561 = vmatpush1.msra.mxu0 0.0
        %562 = vmatprep.subr.mxu0 0.0
        %563 = vmatpush1.msra.mxu0 0.0
        %564 = vmatprep.subr.mxu0 0.0
        %565 = vmatpush1.msra.mxu0 0.0
        %566 = vmatprep.subr.mxu0 0.0
        %567 = vmatpush1.msra.mxu0 0.0
        %568 = vmatprep.subr.mxu0 0.0
        %569 = vmatpush1.msra.mxu0 0.0
        %570 = vmatprep.subr.mxu0 0.0
        %571 = vmatpush1.msra.mxu0 0.0
        %572 = vmatprep.mubr.f32.mxu0 0.0
        %573 = vmatmul.mubr.f32.gmra.mrb[0].mxu0 %v499
        %v574 = vpop.f32.mrb[0].mxu0
        %v575 = vadd.f32 0.0, %v574
        %v576 = vpop.f32.mrb[0].mxu0
        %577 = vmatprep.mubr.f32.mxu0 0.0
        %578 = vmatmul.mubr.f32.gmra.mrb[0].mxu0 %v502
        %v579 = vpop.f32.mrb[0].mxu0
        %v580 = vadd.f32 0.0, %v579
        %v581 = vpop.f32.mrb[0].mxu0
        %582 = vdwg.mxu0
        %vm583 = vcmask 130048
        %v585 = vsel %vm583, %v575, 0
        %v588 = vsel %vm583, %v580, 0
        %590 = vmatprep.subr.mxu0 0.0
        %591 = vmatpush1.msra.mxu0 %v413
        %592 = vmatprep.subr.mxu0 0.0
        %593 = vmatpush1.msra.mxu0 %v414
        %594 = vmatprep.subr.mxu0 0.0
        %595 = vmatpush1.msra.mxu0 0.0
        %596 = vmatprep.subr.mxu0 0.0
        %597 = vmatpush1.msra.mxu0 0.0
        %598 = vmatprep.subr.mxu0 0.0
        %599 = vmatpush1.msra.mxu0 0.0
        %600 = vmatprep.subr.mxu0 0.0
        %601 = vmatpush1.msra.mxu0 0.0
        %602 = vmatprep.subr.mxu0 0.0
        %603 = vmatpush1.msra.mxu0 0.0
        %604 = vmatprep.subr.mxu0 0.0
        %605 = vmatpush1.msra.mxu0 0.0
        %606 = vmatprep.subr.mxu0 0.0
        %607 = vmatpush1.msra.mxu0 0.0
        %608 = vmatprep.subr.mxu0 0.0
        %609 = vmatpush1.msra.mxu0 0.0
        %610 = vmatprep.subr.mxu0 0.0
        %611 = vmatpush1.msra.mxu0 0.0
        %612 = vmatprep.subr.mxu0 0.0
        %613 = vmatpush1.msra.mxu0 0.0
        %614 = vmatprep.subr.mxu0 0.0
        %615 = vmatpush1.msra.mxu0 0.0
        %616 = vmatprep.subr.mxu0 0.0
        %617 = vmatpush1.msra.mxu0 0.0
        %618 = vmatprep.subr.mxu0 0.0
        %619 = vmatpush1.msra.mxu0 0.0
        %620 = vmatprep.subr.mxu0 0.0
        %621 = vmatpush1.msra.mxu0 0.0
        %622 = vmatprep.subr.mxu0 0.0
        %623 = vmatpush1.msra.mxu0 0.0
        %624 = vmatprep.subr.mxu0 0.0
        %625 = vmatpush1.msra.mxu0 0.0
        %626 = vmatprep.subr.mxu0 0.0
        %627 = vmatpush1.msra.mxu0 0.0
        %628 = vmatprep.subr.mxu0 0.0
        %629 = vmatpush1.msra.mxu0 0.0
        %630 = vmatprep.subr.mxu0 0.0
        %631 = vmatpush1.msra.mxu0 0.0
        %632 = vmatprep.subr.mxu0 0.0
        %633 = vmatpush1.msra.mxu0 0.0
        %634 = vmatprep.subr.mxu0 0.0
        %635 = vmatpush1.msra.mxu0 0.0
        %636 = vmatprep.subr.mxu0 0.0
        %637 = vmatpush1.msra.mxu0 0.0
        %638 = vmatprep.subr.mxu0 0.0
        %639 = vmatpush1.msra.mxu0 0.0
        %640 = vmatprep.subr.mxu0 0.0
        %641 = vmatpush1.msra.mxu0 0.0
        %642 = vmatprep.subr.mxu0 0.0
        %643 = vmatpush1.msra.mxu0 0.0
        %644 = vmatprep.subr.mxu0 0.0
        %645 = vmatpush1.msra.mxu0 0.0
        %646 = vmatprep.subr.mxu0 0.0
        %647 = vmatpush1.msra.mxu0 0.0
        %648 = vmatprep.subr.mxu0 0.0
        %649 = vmatpush1.msra.mxu0 0.0
        %650 = vmatprep.subr.mxu0 0.0
        %651 = vmatpush1.msra.mxu0 0.0
        %652 = vmatprep.subr.mxu0 0.0
        %653 = vmatpush1.msra.mxu0 0.0
        %654 = vmatprep.mubr.f32.mxu0 0.0
        %655 = vmatmul.mubr.f32.gmra.mrb[0].mxu0 %v585
        %v656 = vpop.f32.mrb[0].mxu0
        %v657 = vadd.f32 0.0, %v656
        %v658 = vpop.f32.mrb[0].mxu0
        %659 = vmatprep.mubr.f32.mxu0 0.0
        %660 = vmatmul.mubr.f32.gmra.mrb[0].mxu0 %v588
        %v661 = vpop.f32.mrb[0].mxu0
        %v662 = vadd.f32 0.0, %v661
        %v663 = vpop.f32.mrb[0].mxu0
        %664 = vdwg.mxu0
        %vm665 = vcmask 261120
        %666 = vst.msk [vmem:[%s387] sm:$0xff] %vm665, %v657
        %667 = vst.msk [vmem:[%s387 + $0x8] sm:$0xff] %vm665, %v662
        %v668 = vrot.slane %v415, 1
        %s669 = vtos %v668
        %v670 = vstv %s669
        %v672 = vmul.f32 %v424, %v670
        %v673 = vmul.f32 %v425, %v670
        %674 = vrot.lane.b32.xlu0 %v668, 127
        %v675 = vpop.permute.xlu0 %674
        %s676 = vtos %v675
        %v677 = vstv %s676
        %v679 = vmul.f32 %v432, %v677
        %v680 = vmul.f32 %v433, %v677
        %v681 = vadd.f32 %v672, %v679
        %v682 = vadd.f32 %v673, %v680
        %683 = vrot.lane.b32.xlu0 %v668, 126
        %v684 = vpop.permute.xlu0 %683
        %s685 = vtos %v684
        %v686 = vstv %s685
        %v688 = vmul.f32 %v441, %v686
        %v689 = vmul.f32 %v442, %v686
        %v690 = vadd.f32 %v681, %v688
        %v691 = vadd.f32 %v682, %v689
        %692 = vrot.lane.b32.xlu0 %v668, 125
        %v693 = vpop.permute.xlu0 %692
        %s694 = vtos %v693
        %v695 = vstv %s694
        %v697 = vmul.f32 %v450, %v695
        %v698 = vmul.f32 %v451, %v695
        %v699 = vadd.f32 %v690, %v697
        %v700 = vadd.f32 %v691, %v698
        %v701 = vrot.slane %v416, 1
        %s702 = vtos %v701
        %v703 = vstv %s702
        %v705 = vadd.f32 %v699, %v703
        %v706 = vadd.f32 %v700, %v703
        %vm707 = vcmp.gt.f32.partialorder %v705, 0.0
        %vm708 = vcmp.gt.f32.partialorder %v706, 0.0
        %v709 = vmul.f32 %v705, 0.1
        %v710 = vmul.f32 %v706, 0.1
        %v711 = vsel %vm707, %v705, %v709
        %v712 = vsel %vm708, %v706, %v710
        %v714 = vsel %vm504, %v712, 0
        %716 = vmatprep.subr.mxu0 0.0
        %717 = vmatpush1.msra.mxu0 %v711
        %718 = vmatprep.subr.mxu0 0.0
        %719 = vmatpush1.msra.mxu0 %v714
        %720 = vmatprep.subr.mxu0 0.0
        %721 = vmatpush1.msra.mxu0 0.0
        %722 = vmatprep.subr.mxu0 0.0
        %723 = vmatpush1.msra.mxu0 0.0
        %724 = vmatprep.subr.mxu0 0.0
        %725 = vmatpush1.msra.mxu0 0.0
        %726 = vmatprep.subr.mxu0 0.0
        %727 = vmatpush1.msra.mxu0 0.0
        %728 = vmatprep.subr.mxu0 0.0
        %729 = vmatpush1.msra.mxu0 0.0
        %730 = vmatprep.subr.mxu0 0.0
        %731 = vmatpush1.msra.mxu0 0.0
        %732 = vmatprep.subr.mxu0 0.0
        %733 = vmatpush1.msra.mxu0 0.0
        %734 = vmatprep.subr.mxu0 0.0
        %735 = vmatpush1.msra.mxu0 0.0
        %736 = vmatprep.subr.mxu0 0.0
        %737 = vmatpush1.msra.mxu0 0.0
        %738 = vmatprep.subr.mxu0 0.0
        %739 = vmatpush1.msra.mxu0 0.0
        %740 = vmatprep.subr.mxu0 0.0
        %741 = vmatpush1.msra.mxu0 0.0
        %742 = vmatprep.subr.mxu0 0.0
        %743 = vmatpush1.msra.mxu0 0.0
        %744 = vmatprep.subr.mxu0 0.0
        %745 = vmatpush1.msra.mxu0 0.0
        %746 = vmatprep.subr.mxu0 0.0
        %747 = vmatpush1.msra.mxu0 0.0
        %748 = vmatprep.subr.mxu0 0.0
        %749 = vmatpush1.msra.mxu0 0.0
        %750 = vmatprep.subr.mxu0 0.0
        %751 = vmatpush1.msra.mxu0 0.0
        %752 = vmatprep.subr.mxu0 0.0
        %753 = vmatpush1.msra.mxu0 0.0
        %754 = vmatprep.subr.mxu0 0.0
        %755 = vmatpush1.msra.mxu0 0.0
        %756 = vmatprep.subr.mxu0 0.0
        %757 = vmatpush1.msra.mxu0 0.0
        %758 = vmatprep.subr.mxu0 0.0
        %759 = vmatpush1.msra.mxu0 0.0
        %760 = vmatprep.subr.mxu0 0.0
        %761 = vmatpush1.msra.mxu0 0.0
        %762 = vmatprep.subr.mxu0 0.0
        %763 = vmatpush1.msra.mxu0 0.0
        %764 = vmatprep.subr.mxu0 0.0
        %765 = vmatpush1.msra.mxu0 0.0
        %766 = vmatprep.subr.mxu0 0.0
        %767 = vmatpush1.msra.mxu0 0.0
        %768 = vmatprep.subr.mxu0 0.0
        %769 = vmatpush1.msra.mxu0 0.0
        %770 = vmatprep.subr.mxu0 0.0
        %771 = vmatpush1.msra.mxu0 0.0
        %772 = vmatprep.subr.mxu0 0.0
        %773 = vmatpush1.msra.mxu0 0.0
        %774 = vmatprep.subr.mxu0 0.0
        %775 = vmatpush1.msra.mxu0 0.0
        %776 = vmatprep.subr.mxu0 0.0
        %777 = vmatpush1.msra.mxu0 0.0
        %778 = vmatprep.subr.mxu0 0.0
        %779 = vmatpush1.msra.mxu0 0.0
        %780 = vmatprep.mubr.f32.mxu0 0.0
        %781 = vmatmul.mubr.f32.gmra.mrb[0].mxu0 %v499
        %v782 = vpop.f32.mrb[0].mxu0
        %v783 = vadd.f32 0.0, %v782
        %v784 = vpop.f32.mrb[0].mxu0
        %785 = vmatprep.mubr.f32.mxu0 0.0
        %786 = vmatmul.mubr.f32.gmra.mrb[0].mxu0 %v502
        %v787 = vpop.f32.mrb[0].mxu0
        %v788 = vadd.f32 0.0, %v787
        %v789 = vpop.f32.mrb[0].mxu0
        %790 = vdwg.mxu0
        %v792 = vsel %vm583, %v783, 0
        %v795 = vsel %vm583, %v788, 0
        %797 = vmatprep.subr.mxu0 0.0
        %798 = vmatpush1.msra.mxu0 %v413
        %799 = vmatprep.subr.mxu0 0.0
        %800 = vmatpush1.msra.mxu0 %v414
        %801 = vmatprep.subr.mxu0 0.0
        %802 = vmatpush1.msra.mxu0 0.0
        %803 = vmatprep.subr.mxu0 0.0
        %804 = vmatpush1.msra.mxu0 0.0
        %805 = vmatprep.subr.mxu0 0.0
        %806 = vmatpush1.msra.mxu0 0.0
        %807 = vmatprep.subr.mxu0 0.0
        %808 = vmatpush1.msra.mxu0 0.0
        %809 = vmatprep.subr.mxu0 0.0
        %810 = vmatpush1.msra.mxu0 0.0
        %811 = vmatprep.subr.mxu0 0.0
        %812 = vmatpush1.msra.mxu0 0.0
        %813 = vmatprep.subr.mxu0 0.0
        %814 = vmatpush1.msra.mxu0 0.0
        %815 = vmatprep.subr.mxu0 0.0
        %816 = vmatpush1.msra.mxu0 0.0
        %817 = vmatprep.subr.mxu0 0.0
        %818 = vmatpush1.msra.mxu0 0.0
        %819 = vmatprep.subr.mxu0 0.0
        %820 = vmatpush1.msra.mxu0 0.0
        %821 = vmatprep.subr.mxu0 0.0
        %822 = vmatpush1.msra.mxu0 0.0
        %823 = vmatprep.subr.mxu0 0.0
        %824 = vmatpush1.msra.mxu0 0.0
        %825 = vmatprep.subr.mxu0 0.0
        %826 = vmatpush1.msra.mxu0 0.0
        %827 = vmatprep.subr.mxu0 0.0
        %828 = vmatpush1.msra.mxu0 0.0
        %829 = vmatprep.subr.mxu0 0.0
        %830 = vmatpush1.msra.mxu0 0.0
        %831 = vmatprep.subr.mxu0 0.0
        %832 = vmatpush1.msra.mxu0 0.0
        %833 = vmatprep.subr.mxu0 0.0
        %834 = vmatpush1.msra.mxu0 0.0
        %835 = vmatprep.subr.mxu0 0.0
        %836 = vmatpush1.msra.mxu0 0.0
        %837 = vmatprep.subr.mxu0 0.0
        %838 = vmatpush1.msra.mxu0 0.0
        %839 = vmatprep.subr.mxu0 0.0
        %840 = vmatpush1.msra.mxu0 0.0
        %841 = vmatprep.subr.mxu0 0.0
        %842 = vmatpush1.msra.mxu0 0.0
        %843 = vmatprep.subr.mxu0 0.0
        %844 = vmatpush1.msra.mxu0 0.0
        %845 = vmatprep.subr.mxu0 0.0
        %846 = vmatpush1.msra.mxu0 0.0
        %847 = vmatprep.subr.mxu0 0.0
        %848 = vmatpush1.msra.mxu0 0.0
        %849 = vmatprep.subr.mxu0 0.0
        %850 = vmatpush1.msra.mxu0 0.0
        %851 = vmatprep.subr.mxu0 0.0
        %852 = vmatpush1.msra.mxu0 0.0
        %853 = vmatprep.subr.mxu0 0.0
        %854 = vmatpush1.msra.mxu0 0.0
        %855 = vmatprep.subr.mxu0 0.0
        %856 = vmatpush1.msra.mxu0 0.0
        %857 = vmatprep.subr.mxu0 0.0
        %858 = vmatpush1.msra.mxu0 0.0
        %859 = vmatprep.subr.mxu0 0.0
        %860 = vmatpush1.msra.mxu0 0.0
        %861 = vmatprep.mubr.f32.mxu0 0.0
        %862 = vmatmul.mubr.f32.gmra.mrb[0].mxu0 %v792
        %v863 = vpop.f32.mrb[0].mxu0
        %v864 = vadd.f32 0.0, %v863
        %v865 = vpop.f32.mrb[0].mxu0
        %866 = vmatprep.mubr.f32.mxu0 0.0
        %867 = vmatmul.mubr.f32.gmra.mrb[0].mxu0 %v795
        %v868 = vpop.f32.mrb[0].mxu0
        %v869 = vadd.f32 0.0, %v868
        %v870 = vpop.f32.mrb[0].mxu0
        %871 = vdwg.mxu0
        %s872 = scalar_lea.vmem %s387, 16 [#allocation3]
        %873 = vst.msk [vmem:[%s872] sm:$0xff] %vm665, %v864
        %874 = vst.msk [vmem:[%s872 + $0x8] sm:$0xff] %vm665, %v869
        %v875 = vrot.slane %v415, 2
        %s876 = vtos %v875
        %v877 = vstv %s876
        %v879 = vmul.f32 %v424, %v877
        %v880 = vmul.f32 %v425, %v877
        %881 = vrot.lane.b32.xlu0 %v875, 127
        %v882 = vpop.permute.xlu0 %881
        %s883 = vtos %v882
        %v884 = vstv %s883
        %v886 = vmul.f32 %v432, %v884
        %v887 = vmul.f32 %v433, %v884
        %v888 = vadd.f32 %v879, %v886
        %v889 = vadd.f32 %v880, %v887
        %890 = vrot.lane.b32.xlu0 %v875, 126
        %v891 = vpop.permute.xlu0 %890
        %s892 = vtos %v891
        %v893 = vstv %s892
        %v895 = vmul.f32 %v441, %v893
        %v896 = vmul.f32 %v442, %v893
        %v897 = vadd.f32 %v888, %v895
        %v898 = vadd.f32 %v889, %v896
        %899 = vrot.lane.b32.xlu0 %v875, 125
        %v900 = vpop.permute.xlu0 %899
        %s901 = vtos %v900
        %v902 = vstv %s901
        %v904 = vmul.f32 %v450, %v902
        %v905 = vmul.f32 %v451, %v902
        %v906 = vadd.f32 %v897, %v904
        %v907 = vadd.f32 %v898, %v905
        %v908 = vrot.slane %v416, 2
        %s909 = vtos %v908
        %v910 = vstv %s909
        %v912 = vadd.f32 %v906, %v910
        %v913 = vadd.f32 %v907, %v910
        %vm914 = vcmp.gt.f32.partialorder %v912, 0.0
        %vm915 = vcmp.gt.f32.partialorder %v913, 0.0
        %v916 = vmul.f32 %v912, 0.1
        %v917 = vmul.f32 %v913, 0.1
        %v918 = vsel %vm914, %v912, %v916
        %v919 = vsel %vm915, %v913, %v917
        %v921 = vsel %vm504, %v919, 0
        %923 = vmatprep.subr.mxu0 0.0
        %924 = vmatpush1.msra.mxu0 %v918
        %925 = vmatprep.subr.mxu0 0.0
        %926 = vmatpush1.msra.mxu0 %v921
        %927 = vmatprep.subr.mxu0 0.0
        %928 = vmatpush1.msra.mxu0 0.0
        %929 = vmatprep.subr.mxu0 0.0
        %930 = vmatpush1.msra.mxu0 0.0
        %931 = vmatprep.subr.mxu0 0.0
        %932 = vmatpush1.msra.mxu0 0.0
        %933 = vmatprep.subr.mxu0 0.0
        %934 = vmatpush1.msra.mxu0 0.0
        %935 = vmatprep.subr.mxu0 0.0
        %936 = vmatpush1.msra.mxu0 0.0
        %937 = vmatprep.subr.mxu0 0.0
        %938 = vmatpush1.msra.mxu0 0.0
        %939 = vmatprep.subr.mxu0 0.0
        %940 = vmatpush1.msra.mxu0 0.0
        %941 = vmatprep.subr.mxu0 0.0
        %942 = vmatpush1.msra.mxu0 0.0
        %943 = vmatprep.subr.mxu0 0.0
        %944 = vmatpush1.msra.mxu0 0.0
        %945 = vmatprep.subr.mxu0 0.0
        %946 = vmatpush1.msra.mxu0 0.0
        %947 = vmatprep.subr.mxu0 0.0
        %948 = vmatpush1.msra.mxu0 0.0
        %949 = vmatprep.subr.mxu0 0.0
        %950 = vmatpush1.msra.mxu0 0.0
        %951 = vmatprep.subr.mxu0 0.0
        %952 = vmatpush1.msra.mxu0 0.0
        %953 = vmatprep.subr.mxu0 0.0
        %954 = vmatpush1.msra.mxu0 0.0
        %955 = vmatprep.subr.mxu0 0.0
        %956 = vmatpush1.msra.mxu0 0.0
        %957 = vmatprep.subr.mxu0 0.0
        %958 = vmatpush1.msra.mxu0 0.0
        %959 = vmatprep.subr.mxu0 0.0
        %960 = vmatpush1.msra.mxu0 0.0
        %961 = vmatprep.subr.mxu0 0.0
        %962 = vmatpush1.msra.mxu0 0.0
        %963 = vmatprep.subr.mxu0 0.0
        %964 = vmatpush1.msra.mxu0 0.0
        %965 = vmatprep.subr.mxu0 0.0
        %966 = vmatpush1.msra.mxu0 0.0
        %967 = vmatprep.subr.mxu0 0.0
        %968 = vmatpush1.msra.mxu0 0.0
        %969 = vmatprep.subr.mxu0 0.0
        %970 = vmatpush1.msra.mxu0 0.0
        %971 = vmatprep.subr.mxu0 0.0
        %972 = vmatpush1.msra.mxu0 0.0
        %973 = vmatprep.subr.mxu0 0.0
        %974 = vmatpush1.msra.mxu0 0.0
        %975 = vmatprep.subr.mxu0 0.0
        %976 = vmatpush1.msra.mxu0 0.0
        %977 = vmatprep.subr.mxu0 0.0
        %978 = vmatpush1.msra.mxu0 0.0
        %979 = vmatprep.subr.mxu0 0.0
        %980 = vmatpush1.msra.mxu0 0.0
        %981 = vmatprep.subr.mxu0 0.0
        %982 = vmatpush1.msra.mxu0 0.0
        %983 = vmatprep.subr.mxu0 0.0
        %984 = vmatpush1.msra.mxu0 0.0
        %985 = vmatprep.subr.mxu0 0.0
        %986 = vmatpush1.msra.mxu0 0.0
        %987 = vmatprep.mubr.f32.mxu0 0.0
        %988 = vmatmul.mubr.f32.gmra.mrb[0].mxu0 %v499
        %v989 = vpop.f32.mrb[0].mxu0
        %v990 = vadd.f32 0.0, %v989
        %v991 = vpop.f32.mrb[0].mxu0
        %992 = vmatprep.mubr.f32.mxu0 0.0
        %993 = vmatmul.mubr.f32.gmra.mrb[0].mxu0 %v502
        %v994 = vpop.f32.mrb[0].mxu0
        %v995 = vadd.f32 0.0, %v994
        %v996 = vpop.f32.mrb[0].mxu0
        %997 = vdwg.mxu0
        %v999 = vsel %vm583, %v990, 0
        %v1002 = vsel %vm583, %v995, 0
        %1004 = vmatprep.subr.mxu0 0.0
        %1005 = vmatpush1.msra.mxu0 %v413
        %1006 = vmatprep.subr.mxu0 0.0
        %1007 = vmatpush1.msra.mxu0 %v414
        %1008 = vmatprep.subr.mxu0 0.0
        %1009 = vmatpush1.msra.mxu0 0.0
        %1010 = vmatprep.subr.mxu0 0.0
        %1011 = vmatpush1.msra.mxu0 0.0
        %1012 = vmatprep.subr.mxu0 0.0
        %1013 = vmatpush1.msra.mxu0 0.0
        %1014 = vmatprep.subr.mxu0 0.0
        %1015 = vmatpush1.msra.mxu0 0.0
        %1016 = vmatprep.subr.mxu0 0.0
        %1017 = vmatpush1.msra.mxu0 0.0
        %1018 = vmatprep.subr.mxu0 0.0
        %1019 = vmatpush1.msra.mxu0 0.0
        %1020 = vmatprep.subr.mxu0 0.0
        %1021 = vmatpush1.msra.mxu0 0.0
        %1022 = vmatprep.subr.mxu0 0.0
        %1023 = vmatpush1.msra.mxu0 0.0
        %1024 = vmatprep.subr.mxu0 0.0
        %1025 = vmatpush1.msra.mxu0 0.0
        %1026 = vmatprep.subr.mxu0 0.0
        %1027 = vmatpush1.msra.mxu0 0.0
        %1028 = vmatprep.subr.mxu0 0.0
        %1029 = vmatpush1.msra.mxu0 0.0
        %1030 = vmatprep.subr.mxu0 0.0
        %1031 = vmatpush1.msra.mxu0 0.0
        %1032 = vmatprep.subr.mxu0 0.0
        %1033 = vmatpush1.msra.mxu0 0.0
        %1034 = vmatprep.subr.mxu0 0.0
        %1035 = vmatpush1.msra.mxu0 0.0
        %1036 = vmatprep.subr.mxu0 0.0
        %1037 = vmatpush1.msra.mxu0 0.0
        %1038 = vmatprep.subr.mxu0 0.0
        %1039 = vmatpush1.msra.mxu0 0.0
        %1040 = vmatprep.subr.mxu0 0.0
        %1041 = vmatpush1.msra.mxu0 0.0
        %1042 = vmatprep.subr.mxu0 0.0
        %1043 = vmatpush1.msra.mxu0 0.0
        %1044 = vmatprep.subr.mxu0 0.0
        %1045 = vmatpush1.msra.mxu0 0.0
        %1046 = vmatprep.subr.mxu0 0.0
        %1047 = vmatpush1.msra.mxu0 0.0
        %1048 = vmatprep.subr.mxu0 0.0
        %1049 = vmatpush1.msra.mxu0 0.0
        %1050 = vmatprep.subr.mxu0 0.0
        %1051 = vmatpush1.msra.mxu0 0.0
        %1052 = vmatprep.subr.mxu0 0.0
        %1053 = vmatpush1.msra.mxu0 0.0
        %1054 = vmatprep.subr.mxu0 0.0
        %1055 = vmatpush1.msra.mxu0 0.0
        %1056 = vmatprep.subr.mxu0 0.0
        %1057 = vmatpush1.msra.mxu0 0.0
        %1058 = vmatprep.subr.mxu0 0.0
        %1059 = vmatpush1.msra.mxu0 0.0
        %1060 = vmatprep.subr.mxu0 0.0
        %1061 = vmatpush1.msra.mxu0 0.0
        %1062 = vmatprep.subr.mxu0 0.0
        %1063 = vmatpush1.msra.mxu0 0.0
        %1064 = vmatprep.subr.mxu0 0.0
        %1065 = vmatpush1.msra.mxu0 0.0
        %1066 = vmatprep.subr.mxu0 0.0
        %1067 = vmatpush1.msra.mxu0 0.0
        %1068 = vmatprep.mubr.f32.mxu0 0.0
        %1069 = vmatmul.mubr.f32.gmra.mrb[0].mxu0 %v999
        %v1070 = vpop.f32.mrb[0].mxu0
        %v1071 = vadd.f32 0.0, %v1070
        %v1072 = vpop.f32.mrb[0].mxu0
        %1073 = vmatprep.mubr.f32.mxu0 0.0
        %1074 = vmatmul.mubr.f32.gmra.mrb[0].mxu0 %v1002
        %v1075 = vpop.f32.mrb[0].mxu0
        %v1076 = vadd.f32 0.0, %v1075
        %v1077 = vpop.f32.mrb[0].mxu0
        %1078 = vdwg.mxu0
        %s1079 = scalar_lea.vmem %s387, 32 [#allocation3]
        %1080 = vst.msk [vmem:[%s1079] sm:$0xff] %vm665, %v1071
        %1081 = vst.msk [vmem:[%s1079 + $0x8] sm:$0xff] %vm665, %v1076
        %v1082 = vrot.slane %v415, 3
        %s1083 = vtos %v1082
        %v1084 = vstv %s1083
        %v1086 = vmul.f32 %v424, %v1084
        %v1087 = vmul.f32 %v425, %v1084
        %1088 = vrot.lane.b32.xlu0 %v1082, 127
        %v1089 = vpop.permute.xlu0 %1088
        %s1090 = vtos %v1089
        %v1091 = vstv %s1090
        %v1093 = vmul.f32 %v432, %v1091
        %v1094 = vmul.f32 %v433, %v1091
        %v1095 = vadd.f32 %v1086, %v1093
        %v1096 = vadd.f32 %v1087, %v1094
        %1097 = vrot.lane.b32.xlu0 %v1082, 126
        %v1098 = vpop.permute.xlu0 %1097
        %s1099 = vtos %v1098
        %v1100 = vstv %s1099
        %v1102 = vmul.f32 %v441, %v1100
        %v1103 = vmul.f32 %v442, %v1100
        %v1104 = vadd.f32 %v1095, %v1102
        %v1105 = vadd.f32 %v1096, %v1103
        %1106 = vrot.lane.b32.xlu0 %v1082, 125
        %v1107 = vpop.permute.xlu0 %1106
        %s1108 = vtos %v1107
        %v1109 = vstv %s1108
        %v1111 = vmul.f32 %v450, %v1109
        %v1112 = vmul.f32 %v451, %v1109
        %v1113 = vadd.f32 %v1104, %v1111
        %v1114 = vadd.f32 %v1105, %v1112
        %v1115 = vrot.slane %v416, 3
        %s1116 = vtos %v1115
        %v1117 = vstv %s1116
        %v1119 = vadd.f32 %v1113, %v1117
        %v1120 = vadd.f32 %v1114, %v1117
        %vm1121 = vcmp.gt.f32.partialorder %v1119, 0.0
        %vm1122 = vcmp.gt.f32.partialorder %v1120, 0.0
        %v1123 = vmul.f32 %v1119, 0.1
        %v1124 = vmul.f32 %v1120, 0.1
        %v1125 = vsel %vm1121, %v1119, %v1123
        %v1126 = vsel %vm1122, %v1120, %v1124
        %v1128 = vsel %vm504, %v1126, 0
        %1130 = vmatprep.subr.mxu0 0.0
        %1131 = vmatpush1.msra.mxu0 %v1125
        %1132 = vmatprep.subr.mxu0 0.0
        %1133 = vmatpush1.msra.mxu0 %v1128
        %1134 = vmatprep.subr.mxu0 0.0
        %1135 = vmatpush1.msra.mxu0 0.0
        %1136 = vmatprep.subr.mxu0 0.0
        %1137 = vmatpush1.msra.mxu0 0.0
        %1138 = vmatprep.subr.mxu0 0.0
        %1139 = vmatpush1.msra.mxu0 0.0
        %1140 = vmatprep.subr.mxu0 0.0
        %1141 = vmatpush1.msra.mxu0 0.0
        %1142 = vmatprep.subr.mxu0 0.0
        %1143 = vmatpush1.msra.mxu0 0.0
        %1144 = vmatprep.subr.mxu0 0.0
        %1145 = vmatpush1.msra.mxu0 0.0
        %1146 = vmatprep.subr.mxu0 0.0
        %1147 = vmatpush1.msra.mxu0 0.0
        %1148 = vmatprep.subr.mxu0 0.0
        %1149 = vmatpush1.msra.mxu0 0.0
        %1150 = vmatprep.subr.mxu0 0.0
        %1151 = vmatpush1.msra.mxu0 0.0
        %1152 = vmatprep.subr.mxu0 0.0
        %1153 = vmatpush1.msra.mxu0 0.0
        %1154 = vmatprep.subr.mxu0 0.0
        %1155 = vmatpush1.msra.mxu0 0.0
        %1156 = vmatprep.subr.mxu0 0.0
        %1157 = vmatpush1.msra.mxu0 0.0
        %1158 = vmatprep.subr.mxu0 0.0
        %1159 = vmatpush1.msra.mxu0 0.0
        %1160 = vmatprep.subr.mxu0 0.0
        %1161 = vmatpush1.msra.mxu0 0.0
        %1162 = vmatprep.subr.mxu0 0.0
        %1163 = vmatpush1.msra.mxu0 0.0
        %1164 = vmatprep.subr.mxu0 0.0
        %1165 = vmatpush1.msra.mxu0 0.0
        %1166 = vmatprep.subr.mxu0 0.0
        %1167 = vmatpush1.msra.mxu0 0.0
        %1168 = vmatprep.subr.mxu0 0.0
        %1169 = vmatpush1.msra.mxu0 0.0
        %1170 = vmatprep.subr.mxu0 0.0
        %1171 = vmatpush1.msra.mxu0 0.0
        %1172 = vmatprep.subr.mxu0 0.0
        %1173 = vmatpush1.msra.mxu0 0.0
        %1174 = vmatprep.subr.mxu0 0.0
        %1175 = vmatpush1.msra.mxu0 0.0
        %1176 = vmatprep.subr.mxu0 0.0
        %1177 = vmatpush1.msra.mxu0 0.0
        %1178 = vmatprep.subr.mxu0 0.0
        %1179 = vmatpush1.msra.mxu0 0.0
        %1180 = vmatprep.subr.mxu0 0.0
        %1181 = vmatpush1.msra.mxu0 0.0
        %1182 = vmatprep.subr.mxu0 0.0
        %1183 = vmatpush1.msra.mxu0 0.0
        %1184 = vmatprep.subr.mxu0 0.0
        %1185 = vmatpush1.msra.mxu0 0.0
        %1186 = vmatprep.subr.mxu0 0.0
        %1187 = vmatpush1.msra.mxu0 0.0
        %1188 = vmatprep.subr.mxu0 0.0
        %1189 = vmatpush1.msra.mxu0 0.0
        %1190 = vmatprep.subr.mxu0 0.0
        %1191 = vmatpush1.msra.mxu0 0.0
        %1192 = vmatprep.subr.mxu0 0.0
        %1193 = vmatpush1.msra.mxu0 0.0
        %1194 = vmatprep.mubr.f32.mxu0 0.0
        %1195 = vmatmul.mubr.f32.gmra.mrb[0].mxu0 %v499
        %v1196 = vpop.f32.mrb[0].mxu0
        %v1197 = vadd.f32 0.0, %v1196
        %v1198 = vpop.f32.mrb[0].mxu0
        %1199 = vmatprep.mubr.f32.mxu0 0.0
        %1200 = vmatmul.mubr.f32.gmra.mrb[0].mxu0 %v502
        %v1201 = vpop.f32.mrb[0].mxu0
        %v1202 = vadd.f32 0.0, %v1201
        %v1203 = vpop.f32.mrb[0].mxu0
        %1204 = vdwg.mxu0
        %v1206 = vsel %vm583, %v1197, 0
        %v1209 = vsel %vm583, %v1202, 0
        %1211 = vmatprep.subr.mxu0 0.0
        %1212 = vmatpush1.msra.mxu0 %v413
        %1213 = vmatprep.subr.mxu0 0.0
        %1214 = vmatpush1.msra.mxu0 %v414
        %1215 = vmatprep.subr.mxu0 0.0
        %1216 = vmatpush1.msra.mxu0 0.0
        %1217 = vmatprep.subr.mxu0 0.0
        %1218 = vmatpush1.msra.mxu0 0.0
        %1219 = vmatprep.subr.mxu0 0.0
        %1220 = vmatpush1.msra.mxu0 0.0
        %1221 = vmatprep.subr.mxu0 0.0
        %1222 = vmatpush1.msra.mxu0 0.0
        %1223 = vmatprep.subr.mxu0 0.0
        %1224 = vmatpush1.msra.mxu0 0.0
        %1225 = vmatprep.subr.mxu0 0.0
        %1226 = vmatpush1.msra.mxu0 0.0
        %1227 = vmatprep.subr.mxu0 0.0
        %1228 = vmatpush1.msra.mxu0 0.0
        %1229 = vmatprep.subr.mxu0 0.0
        %1230 = vmatpush1.msra.mxu0 0.0
        %1231 = vmatprep.subr.mxu0 0.0
        %1232 = vmatpush1.msra.mxu0 0.0
        %1233 = vmatprep.subr.mxu0 0.0
        %1234 = vmatpush1.msra.mxu0 0.0
        %1235 = vmatprep.subr.mxu0 0.0
        %1236 = vmatpush1.msra.mxu0 0.0
        %1237 = vmatprep.subr.mxu0 0.0
        %1238 = vmatpush1.msra.mxu0 0.0
        %1239 = vmatprep.subr.mxu0 0.0
        %1240 = vmatpush1.msra.mxu0 0.0
        %1241 = vmatprep.subr.mxu0 0.0
        %1242 = vmatpush1.msra.mxu0 0.0
        %1243 = vmatprep.subr.mxu0 0.0
        %1244 = vmatpush1.msra.mxu0 0.0
        %1245 = vmatprep.subr.mxu0 0.0
        %1246 = vmatpush1.msra.mxu0 0.0
        %1247 = vmatprep.subr.mxu0 0.0
        %1248 = vmatpush1.msra.mxu0 0.0
        %1249 = vmatprep.subr.mxu0 0.0
        %1250 = vmatpush1.msra.mxu0 0.0
        %1251 = vmatprep.subr.mxu0 0.0
        %1252 = vmatpush1.msra.mxu0 0.0
        %1253 = vmatprep.subr.mxu0 0.0
        %1254 = vmatpush1.msra.mxu0 0.0
        %1255 = vmatprep.subr.mxu0 0.0
        %1256 = vmatpush1.msra.mxu0 0.0
        %1257 = vmatprep.subr.mxu0 0.0
        %1258 = vmatpush1.msra.mxu0 0.0
        %1259 = vmatprep.subr.mxu0 0.0
        %1260 = vmatpush1.msra.mxu0 0.0
        %1261 = vmatprep.subr.mxu0 0.0
        %1262 = vmatpush1.msra.mxu0 0.0
        %1263 = vmatprep.subr.mxu0 0.0
        %1264 = vmatpush1.msra.mxu0 0.0
        %1265 = vmatprep.subr.mxu0 0.0
        %1266 = vmatpush1.msra.mxu0 0.0
        %1267 = vmatprep.subr.mxu0 0.0
        %1268 = vmatpush1.msra.mxu0 0.0
        %1269 = vmatprep.subr.mxu0 0.0
        %1270 = vmatpush1.msra.mxu0 0.0
        %1271 = vmatprep.subr.mxu0 0.0
        %1272 = vmatpush1.msra.mxu0 0.0
        %1273 = vmatprep.subr.mxu0 0.0
        %1274 = vmatpush1.msra.mxu0 0.0
        %1275 = vmatprep.mubr.f32.mxu0 0.0
        %1276 = vmatmul.mubr.f32.gmra.mrb[0].mxu0 %v1206
        %v1277 = vpop.f32.mrb[0].mxu0
        %v1278 = vadd.f32 0.0, %v1277
        %v1279 = vpop.f32.mrb[0].mxu0
        %1280 = vmatprep.mubr.f32.mxu0 0.0
        %1281 = vmatmul.mubr.f32.gmra.mrb[0].mxu0 %v1209
        %v1282 = vpop.f32.mrb[0].mxu0
        %v1283 = vadd.f32 0.0, %v1282
        %v1284 = vpop.f32.mrb[0].mxu0
        %1285 = vdwg.mxu0
        %s1286 = scalar_lea.vmem %s387, 48 [#allocation3]
        %1287 = vst.msk [vmem:[%s1286] sm:$0xff] %vm665, %v1278
        %1288 = vst.msk [vmem:[%s1286 + $0x8] sm:$0xff] %vm665, %v1283
        %v1289 = vrot.slane %v415, 4
        %s1290 = vtos %v1289
        %v1291 = vstv %s1290
        %v1293 = vmul.f32 %v424, %v1291
        %v1294 = vmul.f32 %v425, %v1291
        %1295 = vrot.lane.b32.xlu0 %v1289, 127
        %v1296 = vpop.permute.xlu0 %1295
        %s1297 = vtos %v1296
        %v1298 = vstv %s1297
        %v1300 = vmul.f32 %v432, %v1298
        %v1301 = vmul.f32 %v433, %v1298
        %v1302 = vadd.f32 %v1293, %v1300
        %v1303 = vadd.f32 %v1294, %v1301
        %1304 = vrot.lane.b32.xlu0 %v1289, 126
        %v1305 = vpop.permute.xlu0 %1304
        %s1306 = vtos %v1305
        %v1307 = vstv %s1306
        %v1309 = vmul.f32 %v441, %v1307
        %v1310 = vmul.f32 %v442, %v1307
        %v1311 = vadd.f32 %v1302, %v1309
        %v1312 = vadd.f32 %v1303, %v1310
        %1313 = vrot.lane.b32.xlu0 %v1289, 125
        %v1314 = vpop.permute.xlu0 %1313
        %s1315 = vtos %v1314
        %v1316 = vstv %s1315
        %v1318 = vmul.f32 %v450, %v1316
        %v1319 = vmul.f32 %v451, %v1316
        %v1320 = vadd.f32 %v1311, %v1318
        %v1321 = vadd.f32 %v1312, %v1319
        %v1322 = vrot.slane %v416, 4
        %s1323 = vtos %v1322
        %v1324 = vstv %s1323
        %v1326 = vadd.f32 %v1320, %v1324
        %v1327 = vadd.f32 %v1321, %v1324
        %vm1328 = vcmp.gt.f32.partialorder %v1326, 0.0
        %vm1329 = vcmp.gt.f32.partialorder %v1327, 0.0
        %v1330 = vmul.f32 %v1326, 0.1
        %v1331 = vmul.f32 %v1327, 0.1
        %v1332 = vsel %vm1328, %v1326, %v1330
        %v1333 = vsel %vm1329, %v1327, %v1331
        %v1335 = vsel %vm504, %v1333, 0
        %1337 = vmatprep.subr.mxu0 0.0
        %1338 = vmatpush1.msra.mxu0 %v1332
        %1339 = vmatprep.subr.mxu0 0.0
        %1340 = vmatpush1.msra.mxu0 %v1335
        %1341 = vmatprep.subr.mxu0 0.0
        %1342 = vmatpush1.msra.mxu0 0.0
        %1343 = vmatprep.subr.mxu0 0.0
        %1344 = vmatpush1.msra.mxu0 0.0
        %1345 = vmatprep.subr.mxu0 0.0
        %1346 = vmatpush1.msra.mxu0 0.0
        %1347 = vmatprep.subr.mxu0 0.0
        %1348 = vmatpush1.msra.mxu0 0.0
        %1349 = vmatprep.subr.mxu0 0.0
        %1350 = vmatpush1.msra.mxu0 0.0
        %1351 = vmatprep.subr.mxu0 0.0
        %1352 = vmatpush1.msra.mxu0 0.0
        %1353 = vmatprep.subr.mxu0 0.0
        %1354 = vmatpush1.msra.mxu0 0.0
        %1355 = vmatprep.subr.mxu0 0.0
        %1356 = vmatpush1.msra.mxu0 0.0
        %1357 = vmatprep.subr.mxu0 0.0
        %1358 = vmatpush1.msra.mxu0 0.0
        %1359 = vmatprep.subr.mxu0 0.0
        %1360 = vmatpush1.msra.mxu0 0.0
        %1361 = vmatprep.subr.mxu0 0.0
        %1362 = vmatpush1.msra.mxu0 0.0
        %1363 = vmatprep.subr.mxu0 0.0
        %1364 = vmatpush1.msra.mxu0 0.0
        %1365 = vmatprep.subr.mxu0 0.0
        %1366 = vmatpush1.msra.mxu0 0.0
        %1367 = vmatprep.subr.mxu0 0.0
        %1368 = vmatpush1.msra.mxu0 0.0
        %1369 = vmatprep.subr.mxu0 0.0
        %1370 = vmatpush1.msra.mxu0 0.0
        %1371 = vmatprep.subr.mxu0 0.0
        %1372 = vmatpush1.msra.mxu0 0.0
        %1373 = vmatprep.subr.mxu0 0.0
        %1374 = vmatpush1.msra.mxu0 0.0
        %1375 = vmatprep.subr.mxu0 0.0
        %1376 = vmatpush1.msra.mxu0 0.0
        %1377 = vmatprep.subr.mxu0 0.0
        %1378 = vmatpush1.msra.mxu0 0.0
        %1379 = vmatprep.subr.mxu0 0.0
        %1380 = vmatpush1.msra.mxu0 0.0
        %1381 = vmatprep.subr.mxu0 0.0
        %1382 = vmatpush1.msra.mxu0 0.0
        %1383 = vmatprep.subr.mxu0 0.0
        %1384 = vmatpush1.msra.mxu0 0.0
        %1385 = vmatprep.subr.mxu0 0.0
        %1386 = vmatpush1.msra.mxu0 0.0
        %1387 = vmatprep.subr.mxu0 0.0
        %1388 = vmatpush1.msra.mxu0 0.0
        %1389 = vmatprep.subr.mxu0 0.0
        %1390 = vmatpush1.msra.mxu0 0.0
        %1391 = vmatprep.subr.mxu0 0.0
        %1392 = vmatpush1.msra.mxu0 0.0
        %1393 = vmatprep.subr.mxu0 0.0
        %1394 = vmatpush1.msra.mxu0 0.0
        %1395 = vmatprep.subr.mxu0 0.0
        %1396 = vmatpush1.msra.mxu0 0.0
        %1397 = vmatprep.subr.mxu0 0.0
        %1398 = vmatpush1.msra.mxu0 0.0
        %1399 = vmatprep.subr.mxu0 0.0
        %1400 = vmatpush1.msra.mxu0 0.0
        %1401 = vmatprep.mubr.f32.mxu0 0.0
        %1402 = vmatmul.mubr.f32.gmra.mrb[0].mxu0 %v499
        %v1403 = vpop.f32.mrb[0].mxu0
        %v1404 = vadd.f32 0.0, %v1403
        %v1405 = vpop.f32.mrb[0].mxu0
        %1406 = vmatprep.mubr.f32.mxu0 0.0
        %1407 = vmatmul.mubr.f32.gmra.mrb[0].mxu0 %v502
        %v1408 = vpop.f32.mrb[0].mxu0
        %v1409 = vadd.f32 0.0, %v1408
        %v1410 = vpop.f32.mrb[0].mxu0
        %1411 = vdwg.mxu0
        %v1413 = vsel %vm583, %v1404, 0
        %v1416 = vsel %vm583, %v1409, 0
        %1418 = vmatprep.subr.mxu0 0.0
        %1419 = vmatpush1.msra.mxu0 %v413
        %1420 = vmatprep.subr.mxu0 0.0
        %1421 = vmatpush1.msra.mxu0 %v414
        %1422 = vmatprep.subr.mxu0 0.0
        %1423 = vmatpush1.msra.mxu0 0.0
        %1424 = vmatprep.subr.mxu0 0.0
        %1425 = vmatpush1.msra.mxu0 0.0
        %1426 = vmatprep.subr.mxu0 0.0
        %1427 = vmatpush1.msra.mxu0 0.0
        %1428 = vmatprep.subr.mxu0 0.0
        %1429 = vmatpush1.msra.mxu0 0.0
        %1430 = vmatprep.subr.mxu0 0.0
        %1431 = vmatpush1.msra.mxu0 0.0
        %1432 = vmatprep.subr.mxu0 0.0
        %1433 = vmatpush1.msra.mxu0 0.0
        %1434 = vmatprep.subr.mxu0 0.0
        %1435 = vmatpush1.msra.mxu0 0.0
        %1436 = vmatprep.subr.mxu0 0.0
        %1437 = vmatpush1.msra.mxu0 0.0
        %1438 = vmatprep.subr.mxu0 0.0
        %1439 = vmatpush1.msra.mxu0 0.0
        %1440 = vmatprep.subr.mxu0 0.0
        %1441 = vmatpush1.msra.mxu0 0.0
        %1442 = vmatprep.subr.mxu0 0.0
        %1443 = vmatpush1.msra.mxu0 0.0
        %1444 = vmatprep.subr.mxu0 0.0
        %1445 = vmatpush1.msra.mxu0 0.0
        %1446 = vmatprep.subr.mxu0 0.0
        %1447 = vmatpush1.msra.mxu0 0.0
        %1448 = vmatprep.subr.mxu0 0.0
        %1449 = vmatpush1.msra.mxu0 0.0
        %1450 = vmatprep.subr.mxu0 0.0
        %1451 = vmatpush1.msra.mxu0 0.0
        %1452 = vmatprep.subr.mxu0 0.0
        %1453 = vmatpush1.msra.mxu0 0.0
        %1454 = vmatprep.subr.mxu0 0.0
        %1455 = vmatpush1.msra.mxu0 0.0
        %1456 = vmatprep.subr.mxu0 0.0
        %1457 = vmatpush1.msra.mxu0 0.0
        %1458 = vmatprep.subr.mxu0 0.0
        %1459 = vmatpush1.msra.mxu0 0.0
        %1460 = vmatprep.subr.mxu0 0.0
        %1461 = vmatpush1.msra.mxu0 0.0
        %1462 = vmatprep.subr.mxu0 0.0
        %1463 = vmatpush1.msra.mxu0 0.0
        %1464 = vmatprep.subr.mxu0 0.0
        %1465 = vmatpush1.msra.mxu0 0.0
        %1466 = vmatprep.subr.mxu0 0.0
        %1467 = vmatpush1.msra.mxu0 0.0
        %1468 = vmatprep.subr.mxu0 0.0
        %1469 = vmatpush1.msra.mxu0 0.0
        %1470 = vmatprep.subr.mxu0 0.0
        %1471 = vmatpush1.msra.mxu0 0.0
        %1472 = vmatprep.subr.mxu0 0.0
        %1473 = vmatpush1.msra.mxu0 0.0
        %1474 = vmatprep.subr.mxu0 0.0
        %1475 = vmatpush1.msra.mxu0 0.0
        %1476 = vmatprep.subr.mxu0 0.0
        %1477 = vmatpush1.msra.mxu0 0.0
        %1478 = vmatprep.subr.mxu0 0.0
        %1479 = vmatpush1.msra.mxu0 0.0
        %1480 = vmatprep.subr.mxu0 0.0
        %1481 = vmatpush1.msra.mxu0 0.0
        %1482 = vmatprep.mubr.f32.mxu0 0.0
        %1483 = vmatmul.mubr.f32.gmra.mrb[0].mxu0 %v1413
        %v1484 = vpop.f32.mrb[0].mxu0
        %v1485 = vadd.f32 0.0, %v1484
        %v1486 = vpop.f32.mrb[0].mxu0
        %1487 = vmatprep.mubr.f32.mxu0 0.0
        %1488 = vmatmul.mubr.f32.gmra.mrb[0].mxu0 %v1416
        %v1489 = vpop.f32.mrb[0].mxu0
        %v1490 = vadd.f32 0.0, %v1489
        %v1491 = vpop.f32.mrb[0].mxu0
        %1492 = vdwg.mxu0
        %s1493 = scalar_lea.vmem %s387, 64 [#allocation3]
        %1494 = vst.msk [vmem:[%s1493] sm:$0xff] %vm665, %v1485
        %1495 = vst.msk [vmem:[%s1493 + $0x8] sm:$0xff] %vm665, %v1490
        %v1496 = vrot.slane %v415, 5
        %s1497 = vtos %v1496
        %v1498 = vstv %s1497
        %v1500 = vmul.f32 %v424, %v1498
        %v1501 = vmul.f32 %v425, %v1498
        %1502 = vrot.lane.b32.xlu0 %v1496, 127
        %v1503 = vpop.permute.xlu0 %1502
        %s1504 = vtos %v1503
        %v1505 = vstv %s1504
        %v1507 = vmul.f32 %v432, %v1505
        %v1508 = vmul.f32 %v433, %v1505
        %v1509 = vadd.f32 %v1500, %v1507
        %v1510 = vadd.f32 %v1501, %v1508
        %1511 = vrot.lane.b32.xlu0 %v1496, 126
        %v1512 = vpop.permute.xlu0 %1511
        %s1513 = vtos %v1512
        %v1514 = vstv %s1513
        %v1516 = vmul.f32 %v441, %v1514
        %v1517 = vmul.f32 %v442, %v1514
        %v1518 = vadd.f32 %v1509, %v1516
        %v1519 = vadd.f32 %v1510, %v1517
        %1520 = vrot.lane.b32.xlu0 %v1496, 125
        %v1521 = vpop.permute.xlu0 %1520
        %s1522 = vtos %v1521
        %v1523 = vstv %s1522
        %v1525 = vmul.f32 %v450, %v1523
        %v1526 = vmul.f32 %v451, %v1523
        %v1527 = vadd.f32 %v1518, %v1525
        %v1528 = vadd.f32 %v1519, %v1526
        %v1529 = vrot.slane %v416, 5
        %s1530 = vtos %v1529
        %v1531 = vstv %s1530
        %v1533 = vadd.f32 %v1527, %v1531
        %v1534 = vadd.f32 %v1528, %v1531
        %vm1535 = vcmp.gt.f32.partialorder %v1533, 0.0
        %vm1536 = vcmp.gt.f32.partialorder %v1534, 0.0
        %v1537 = vmul.f32 %v1533, 0.1
        %v1538 = vmul.f32 %v1534, 0.1
        %v1539 = vsel %vm1535, %v1533, %v1537
        %v1540 = vsel %vm1536, %v1534, %v1538
        %v1542 = vsel %vm504, %v1540, 0
        %1544 = vmatprep.subr.mxu0 0.0
        %1545 = vmatpush1.msra.mxu0 %v1539
        %1546 = vmatprep.subr.mxu0 0.0
        %1547 = vmatpush1.msra.mxu0 %v1542
        %1548 = vmatprep.subr.mxu0 0.0
        %1549 = vmatpush1.msra.mxu0 0.0
        %1550 = vmatprep.subr.mxu0 0.0
        %1551 = vmatpush1.msra.mxu0 0.0
        %1552 = vmatprep.subr.mxu0 0.0
        %1553 = vmatpush1.msra.mxu0 0.0
        %1554 = vmatprep.subr.mxu0 0.0
        %1555 = vmatpush1.msra.mxu0 0.0
        %1556 = vmatprep.subr.mxu0 0.0
        %1557 = vmatpush1.msra.mxu0 0.0
        %1558 = vmatprep.subr.mxu0 0.0
        %1559 = vmatpush1.msra.mxu0 0.0
        %1560 = vmatprep.subr.mxu0 0.0
        %1561 = vmatpush1.msra.mxu0 0.0
        %1562 = vmatprep.subr.mxu0 0.0
        %1563 = vmatpush1.msra.mxu0 0.0
        %1564 = vmatprep.subr.mxu0 0.0
        %1565 = vmatpush1.msra.mxu0 0.0
        %1566 = vmatprep.subr.mxu0 0.0
        %1567 = vmatpush1.msra.mxu0 0.0
        %1568 = vmatprep.subr.mxu0 0.0
        %1569 = vmatpush1.msra.mxu0 0.0
        %1570 = vmatprep.subr.mxu0 0.0
        %1571 = vmatpush1.msra.mxu0 0.0
        %1572 = vmatprep.subr.mxu0 0.0
        %1573 = vmatpush1.msra.mxu0 0.0
        %1574 = vmatprep.subr.mxu0 0.0
        %1575 = vmatpush1.msra.mxu0 0.0
        %1576 = vmatprep.subr.mxu0 0.0
        %1577 = vmatpush1.msra.mxu0 0.0
        %1578 = vmatprep.subr.mxu0 0.0
        %1579 = vmatpush1.msra.mxu0 0.0
        %1580 = vmatprep.subr.mxu0 0.0
        %1581 = vmatpush1.msra.mxu0 0.0
        %1582 = vmatprep.subr.mxu0 0.0
        %1583 = vmatpush1.msra.mxu0 0.0
        %1584 = vmatprep.subr.mxu0 0.0
        %1585 = vmatpush1.msra.mxu0 0.0
        %1586 = vmatprep.subr.mxu0 0.0
        %1587 = vmatpush1.msra.mxu0 0.0
        %1588 = vmatprep.subr.mxu0 0.0
        %1589 = vmatpush1.msra.mxu0 0.0
        %1590 = vmatprep.subr.mxu0 0.0
        %1591 = vmatpush1.msra.mxu0 0.0
        %1592 = vmatprep.subr.mxu0 0.0
        %1593 = vmatpush1.msra.mxu0 0.0
        %1594 = vmatprep.subr.mxu0 0.0
        %1595 = vmatpush1.msra.mxu0 0.0
        %1596 = vmatprep.subr.mxu0 0.0
        %1597 = vmatpush1.msra.mxu0 0.0
        %1598 = vmatprep.subr.mxu0 0.0
        %1599 = vmatpush1.msra.mxu0 0.0
        %1600 = vmatprep.subr.mxu0 0.0
        %1601 = vmatpush1.msra.mxu0 0.0
        %1602 = vmatprep.subr.mxu0 0.0
        %1603 = vmatpush1.msra.mxu0 0.0
        %1604 = vmatprep.subr.mxu0 0.0
        %1605 = vmatpush1.msra.mxu0 0.0
        %1606 = vmatprep.subr.mxu0 0.0
        %1607 = vmatpush1.msra.mxu0 0.0
        %1608 = vmatprep.mubr.f32.mxu0 0.0
        %1609 = vmatmul.mubr.f32.gmra.mrb[0].mxu0 %v499
        %v1610 = vpop.f32.mrb[0].mxu0
        %v1611 = vadd.f32 0.0, %v1610
        %v1612 = vpop.f32.mrb[0].mxu0
        %1613 = vmatprep.mubr.f32.mxu0 0.0
        %1614 = vmatmul.mubr.f32.gmra.mrb[0].mxu0 %v502
        %v1615 = vpop.f32.mrb[0].mxu0
        %v1616 = vadd.f32 0.0, %v1615
        %v1617 = vpop.f32.mrb[0].mxu0
        %1618 = vdwg.mxu0
        %v1620 = vsel %vm583, %v1611, 0
        %v1623 = vsel %vm583, %v1616, 0
        %1625 = vmatprep.subr.mxu0 0.0
        %1626 = vmatpush1.msra.mxu0 %v413
        %1627 = vmatprep.subr.mxu0 0.0
        %1628 = vmatpush1.msra.mxu0 %v414
        %1629 = vmatprep.subr.mxu0 0.0
        %1630 = vmatpush1.msra.mxu0 0.0
        %1631 = vmatprep.subr.mxu0 0.0
        %1632 = vmatpush1.msra.mxu0 0.0
        %1633 = vmatprep.subr.mxu0 0.0
        %1634 = vmatpush1.msra.mxu0 0.0
        %1635 = vmatprep.subr.mxu0 0.0
        %1636 = vmatpush1.msra.mxu0 0.0
        %1637 = vmatprep.subr.mxu0 0.0
        %1638 = vmatpush1.msra.mxu0 0.0
        %1639 = vmatprep.subr.mxu0 0.0
        %1640 = vmatpush1.msra.mxu0 0.0
        %1641 = vmatprep.subr.mxu0 0.0
        %1642 = vmatpush1.msra.mxu0 0.0
        %1643 = vmatprep.subr.mxu0 0.0
        %1644 = vmatpush1.msra.mxu0 0.0
        %1645 = vmatprep.subr.mxu0 0.0
        %1646 = vmatpush1.msra.mxu0 0.0
        %1647 = vmatprep.subr.mxu0 0.0
        %1648 = vmatpush1.msra.mxu0 0.0
        %1649 = vmatprep.subr.mxu0 0.0
        %1650 = vmatpush1.msra.mxu0 0.0
        %1651 = vmatprep.subr.mxu0 0.0
        %1652 = vmatpush1.msra.mxu0 0.0
        %1653 = vmatprep.subr.mxu0 0.0
        %1654 = vmatpush1.msra.mxu0 0.0
        %1655 = vmatprep.subr.mxu0 0.0
        %1656 = vmatpush1.msra.mxu0 0.0
        %1657 = vmatprep.subr.mxu0 0.0
        %1658 = vmatpush1.msra.mxu0 0.0
        %1659 = vmatprep.subr.mxu0 0.0
        %1660 = vmatpush1.msra.mxu0 0.0
        %1661 = vmatprep.subr.mxu0 0.0
        %1662 = vmatpush1.msra.mxu0 0.0
        %1663 = vmatprep.subr.mxu0 0.0
        %1664 = vmatpush1.msra.mxu0 0.0
        %1665 = vmatprep.subr.mxu0 0.0
        %1666 = vmatpush1.msra.mxu0 0.0
        %1667 = vmatprep.subr.mxu0 0.0
        %1668 = vmatpush1.msra.mxu0 0.0
        %1669 = vmatprep.subr.mxu0 0.0
        %1670 = vmatpush1.msra.mxu0 0.0
        %1671 = vmatprep.subr.mxu0 0.0
        %1672 = vmatpush1.msra.mxu0 0.0
        %1673 = vmatprep.subr.mxu0 0.0
        %1674 = vmatpush1.msra.mxu0 0.0
        %1675 = vmatprep.subr.mxu0 0.0
        %1676 = vmatpush1.msra.mxu0 0.0
        %1677 = vmatprep.subr.mxu0 0.0
        %1678 = vmatpush1.msra.mxu0 0.0
        %1679 = vmatprep.subr.mxu0 0.0
        %1680 = vmatpush1.msra.mxu0 0.0
        %1681 = vmatprep.subr.mxu0 0.0
        %1682 = vmatpush1.msra.mxu0 0.0
        %1683 = vmatprep.subr.mxu0 0.0
        %1684 = vmatpush1.msra.mxu0 0.0
        %1685 = vmatprep.subr.mxu0 0.0
        %1686 = vmatpush1.msra.mxu0 0.0
        %1687 = vmatprep.subr.mxu0 0.0
        %1688 = vmatpush1.msra.mxu0 0.0
        %1689 = vmatprep.mubr.f32.mxu0 0.0
        %1690 = vmatmul.mubr.f32.gmra.mrb[0].mxu0 %v1620
        %v1691 = vpop.f32.mrb[0].mxu0
        %v1692 = vadd.f32 0.0, %v1691
        %v1693 = vpop.f32.mrb[0].mxu0
        %1694 = vmatprep.mubr.f32.mxu0 0.0
        %1695 = vmatmul.mubr.f32.gmra.mrb[0].mxu0 %v1623
        %v1696 = vpop.f32.mrb[0].mxu0
        %v1697 = vadd.f32 0.0, %v1696
        %v1698 = vpop.f32.mrb[0].mxu0
        %1699 = vdwg.mxu0
        %s1700 = scalar_lea.vmem %s387, 80 [#allocation3]
        %1701 = vst.msk [vmem:[%s1700] sm:$0xff] %vm665, %v1692
        %1702 = vst.msk [vmem:[%s1700 + $0x8] sm:$0xff] %vm665, %v1697
        %v1703 = vrot.slane %v415, 6
        %s1704 = vtos %v1703
        %v1705 = vstv %s1704
        %v1707 = vmul.f32 %v424, %v1705
        %v1708 = vmul.f32 %v425, %v1705
        %1709 = vrot.lane.b32.xlu0 %v1703, 127
        %v1710 = vpop.permute.xlu0 %1709
        %s1711 = vtos %v1710
        %v1712 = vstv %s1711
        %v1714 = vmul.f32 %v432, %v1712
        %v1715 = vmul.f32 %v433, %v1712
        %v1716 = vadd.f32 %v1707, %v1714
        %v1717 = vadd.f32 %v1708, %v1715
        %1718 = vrot.lane.b32.xlu0 %v1703, 126
        %v1719 = vpop.permute.xlu0 %1718
        %s1720 = vtos %v1719
        %v1721 = vstv %s1720
        %v1723 = vmul.f32 %v441, %v1721
        %v1724 = vmul.f32 %v442, %v1721
        %v1725 = vadd.f32 %v1716, %v1723
        %v1726 = vadd.f32 %v1717, %v1724
        %1727 = vrot.lane.b32.xlu0 %v1703, 125
        %v1728 = vpop.permute.xlu0 %1727
        %s1729 = vtos %v1728
        %v1730 = vstv %s1729
        %v1732 = vmul.f32 %v450, %v1730
        %v1733 = vmul.f32 %v451, %v1730
        %v1734 = vadd.f32 %v1725, %v1732
        %v1735 = vadd.f32 %v1726, %v1733
        %v1736 = vrot.slane %v416, 6
        %s1737 = vtos %v1736
        %v1738 = vstv %s1737
        %v1740 = vadd.f32 %v1734, %v1738
        %v1741 = vadd.f32 %v1735, %v1738
        %vm1742 = vcmp.gt.f32.partialorder %v1740, 0.0
        %vm1743 = vcmp.gt.f32.partialorder %v1741, 0.0
        %v1744 = vmul.f32 %v1740, 0.1
        %v1745 = vmul.f32 %v1741, 0.1
        %v1746 = vsel %vm1742, %v1740, %v1744
        %v1747 = vsel %vm1743, %v1741, %v1745
        %v1749 = vsel %vm504, %v1747, 0
        %1751 = vmatprep.subr.mxu0 0.0
        %1752 = vmatpush1.msra.mxu0 %v1746
        %1753 = vmatprep.subr.mxu0 0.0
        %1754 = vmatpush1.msra.mxu0 %v1749
        %1755 = vmatprep.subr.mxu0 0.0
        %1756 = vmatpush1.msra.mxu0 0.0
        %1757 = vmatprep.subr.mxu0 0.0
        %1758 = vmatpush1.msra.mxu0 0.0
        %1759 = vmatprep.subr.mxu0 0.0
        %1760 = vmatpush1.msra.mxu0 0.0
        %1761 = vmatprep.subr.mxu0 0.0
        %1762 = vmatpush1.msra.mxu0 0.0
        %1763 = vmatprep.subr.mxu0 0.0
        %1764 = vmatpush1.msra.mxu0 0.0
        %1765 = vmatprep.subr.mxu0 0.0
        %1766 = vmatpush1.msra.mxu0 0.0
        %1767 = vmatprep.subr.mxu0 0.0
        %1768 = vmatpush1.msra.mxu0 0.0
        %1769 = vmatprep.subr.mxu0 0.0
        %1770 = vmatpush1.msra.mxu0 0.0
        %1771 = vmatprep.subr.mxu0 0.0
        %1772 = vmatpush1.msra.mxu0 0.0
        %1773 = vmatprep.subr.mxu0 0.0
        %1774 = vmatpush1.msra.mxu0 0.0
        %1775 = vmatprep.subr.mxu0 0.0
        %1776 = vmatpush1.msra.mxu0 0.0
        %1777 = vmatprep.subr.mxu0 0.0
        %1778 = vmatpush1.msra.mxu0 0.0
        %1779 = vmatprep.subr.mxu0 0.0
        %1780 = vmatpush1.msra.mxu0 0.0
        %1781 = vmatprep.subr.mxu0 0.0
        %1782 = vmatpush1.msra.mxu0 0.0
        %1783 = vmatprep.subr.mxu0 0.0
        %1784 = vmatpush1.msra.mxu0 0.0
        %1785 = vmatprep.subr.mxu0 0.0
        %1786 = vmatpush1.msra.mxu0 0.0
        %1787 = vmatprep.subr.mxu0 0.0
        %1788 = vmatpush1.msra.mxu0 0.0
        %1789 = vmatprep.subr.mxu0 0.0
        %1790 = vmatpush1.msra.mxu0 0.0
        %1791 = vmatprep.subr.mxu0 0.0
        %1792 = vmatpush1.msra.mxu0 0.0
        %1793 = vmatprep.subr.mxu0 0.0
        %1794 = vmatpush1.msra.mxu0 0.0
        %1795 = vmatprep.subr.mxu0 0.0
        %1796 = vmatpush1.msra.mxu0 0.0
        %1797 = vmatprep.subr.mxu0 0.0
        %1798 = vmatpush1.msra.mxu0 0.0
        %1799 = vmatprep.subr.mxu0 0.0
        %1800 = vmatpush1.msra.mxu0 0.0
        %1801 = vmatprep.subr.mxu0 0.0
        %1802 = vmatpush1.msra.mxu0 0.0
        %1803 = vmatprep.subr.mxu0 0.0
        %1804 = vmatpush1.msra.mxu0 0.0
        %1805 = vmatprep.subr.mxu0 0.0
        %1806 = vmatpush1.msra.mxu0 0.0
        %1807 = vmatprep.subr.mxu0 0.0
        %1808 = vmatpush1.msra.mxu0 0.0
        %1809 = vmatprep.subr.mxu0 0.0
        %1810 = vmatpush1.msra.mxu0 0.0
        %1811 = vmatprep.subr.mxu0 0.0
        %1812 = vmatpush1.msra.mxu0 0.0
        %1813 = vmatprep.subr.mxu0 0.0
        %1814 = vmatpush1.msra.mxu0 0.0
        %1815 = vmatprep.mubr.f32.mxu0 0.0
        %1816 = vmatmul.mubr.f32.gmra.mrb[0].mxu0 %v499
        %v1817 = vpop.f32.mrb[0].mxu0
        %v1818 = vadd.f32 0.0, %v1817
        %v1819 = vpop.f32.mrb[0].mxu0
        %1820 = vmatprep.mubr.f32.mxu0 0.0
        %1821 = vmatmul.mubr.f32.gmra.mrb[0].mxu0 %v502
        %v1822 = vpop.f32.mrb[0].mxu0
        %v1823 = vadd.f32 0.0, %v1822
        %v1824 = vpop.f32.mrb[0].mxu0
        %1825 = vdwg.mxu0
        %v1827 = vsel %vm583, %v1818, 0
        %v1830 = vsel %vm583, %v1823, 0
        %1832 = vmatprep.subr.mxu0 0.0
        %1833 = vmatpush1.msra.mxu0 %v413
        %1834 = vmatprep.subr.mxu0 0.0
        %1835 = vmatpush1.msra.mxu0 %v414
        %1836 = vmatprep.subr.mxu0 0.0
        %1837 = vmatpush1.msra.mxu0 0.0
        %1838 = vmatprep.subr.mxu0 0.0
        %1839 = vmatpush1.msra.mxu0 0.0
        %1840 = vmatprep.subr.mxu0 0.0
        %1841 = vmatpush1.msra.mxu0 0.0
        %1842 = vmatprep.subr.mxu0 0.0
        %1843 = vmatpush1.msra.mxu0 0.0
        %1844 = vmatprep.subr.mxu0 0.0
        %1845 = vmatpush1.msra.mxu0 0.0
        %1846 = vmatprep.subr.mxu0 0.0
        %1847 = vmatpush1.msra.mxu0 0.0
        %1848 = vmatprep.subr.mxu0 0.0
        %1849 = vmatpush1.msra.mxu0 0.0
        %1850 = vmatprep.subr.mxu0 0.0
        %1851 = vmatpush1.msra.mxu0 0.0
        %1852 = vmatprep.subr.mxu0 0.0
        %1853 = vmatpush1.msra.mxu0 0.0
        %1854 = vmatprep.subr.mxu0 0.0
        %1855 = vmatpush1.msra.mxu0 0.0
        %1856 = vmatprep.subr.mxu0 0.0
        %1857 = vmatpush1.msra.mxu0 0.0
        %1858 = vmatprep.subr.mxu0 0.0
        %1859 = vmatpush1.msra.mxu0 0.0
        %1860 = vmatprep.subr.mxu0 0.0
        %1861 = vmatpush1.msra.mxu0 0.0
        %1862 = vmatprep.subr.mxu0 0.0
        %1863 = vmatpush1.msra.mxu0 0.0
        %1864 = vmatprep.subr.mxu0 0.0
        %1865 = vmatpush1.msra.mxu0 0.0
        %1866 = vmatprep.subr.mxu0 0.0
        %1867 = vmatpush1.msra.mxu0 0.0
        %1868 = vmatprep.subr.mxu0 0.0
        %1869 = vmatpush1.msra.mxu0 0.0
        %1870 = vmatprep.subr.mxu0 0.0
        %1871 = vmatpush1.msra.mxu0 0.0
        %1872 = vmatprep.subr.mxu0 0.0
        %1873 = vmatpush1.msra.mxu0 0.0
        %1874 = vmatprep.subr.mxu0 0.0
        %1875 = vmatpush1.msra.mxu0 0.0
        %1876 = vmatprep.subr.mxu0 0.0
        %1877 = vmatpush1.msra.mxu0 0.0
        %1878 = vmatprep.subr.mxu0 0.0
        %1879 = vmatpush1.msra.mxu0 0.0
        %1880 = vmatprep.subr.mxu0 0.0
        %1881 = vmatpush1.msra.mxu0 0.0
        %1882 = vmatprep.subr.mxu0 0.0
        %1883 = vmatpush1.msra.mxu0 0.0
        %1884 = vmatprep.subr.mxu0 0.0
        %1885 = vmatpush1.msra.mxu0 0.0
        %1886 = vmatprep.subr.mxu0 0.0
        %1887 = vmatpush1.msra.mxu0 0.0
        %1888 = vmatprep.subr.mxu0 0.0
        %1889 = vmatpush1.msra.mxu0 0.0
        %1890 = vmatprep.subr.mxu0 0.0
        %1891 = vmatpush1.msra.mxu0 0.0
        %1892 = vmatprep.subr.mxu0 0.0
        %1893 = vmatpush1.msra.mxu0 0.0
        %1894 = vmatprep.subr.mxu0 0.0
        %1895 = vmatpush1.msra.mxu0 0.0
        %1896 = vmatprep.mubr.f32.mxu0 0.0
        %1897 = vmatmul.mubr.f32.gmra.mrb[0].mxu0 %v1827
        %v1898 = vpop.f32.mrb[0].mxu0
        %v1899 = vadd.f32 0.0, %v1898
        %v1900 = vpop.f32.mrb[0].mxu0
        %1901 = vmatprep.mubr.f32.mxu0 0.0
        %1902 = vmatmul.mubr.f32.gmra.mrb[0].mxu0 %v1830
        %v1903 = vpop.f32.mrb[0].mxu0
        %v1904 = vadd.f32 0.0, %v1903
        %v1905 = vpop.f32.mrb[0].mxu0
        %1906 = vdwg.mxu0
        %s1907 = scalar_lea.vmem %s387, 96 [#allocation3]
        %1908 = vst.msk [vmem:[%s1907] sm:$0xff] %vm665, %v1899
        %1909 = vst.msk [vmem:[%s1907 + $0x8] sm:$0xff] %vm665, %v1904
        %v1910 = vrot.slane %v415, 7
        %s1911 = vtos %v1910
        %v1912 = vstv %s1911
        %v1914 = vmul.f32 %v424, %v1912
        %v1915 = vmul.f32 %v425, %v1912
        %1916 = vrot.lane.b32.xlu0 %v1910, 127
        %v1917 = vpop.permute.xlu0 %1916
        %s1918 = vtos %v1917
        %v1919 = vstv %s1918
        %v1921 = vmul.f32 %v432, %v1919
        %v1922 = vmul.f32 %v433, %v1919
        %v1923 = vadd.f32 %v1914, %v1921
        %v1924 = vadd.f32 %v1915, %v1922
        %1925 = vrot.lane.b32.xlu0 %v1910, 126
        %v1926 = vpop.permute.xlu0 %1925
        %s1927 = vtos %v1926
        %v1928 = vstv %s1927
        %v1930 = vmul.f32 %v441, %v1928
        %v1931 = vmul.f32 %v442, %v1928
        %v1932 = vadd.f32 %v1923, %v1930
        %v1933 = vadd.f32 %v1924, %v1931
        %1934 = vrot.lane.b32.xlu0 %v1910, 125
        %v1935 = vpop.permute.xlu0 %1934
        %s1936 = vtos %v1935
        %v1937 = vstv %s1936
        %v1939 = vmul.f32 %v450, %v1937
        %v1940 = vmul.f32 %v451, %v1937
        %v1941 = vadd.f32 %v1932, %v1939
        %v1942 = vadd.f32 %v1933, %v1940
        %v1943 = vrot.slane %v416, 7
        %s1944 = vtos %v1943
        %v1945 = vstv %s1944
        %v1947 = vadd.f32 %v1941, %v1945
        %v1948 = vadd.f32 %v1942, %v1945
        %vm1949 = vcmp.gt.f32.partialorder %v1947, 0.0
        %vm1950 = vcmp.gt.f32.partialorder %v1948, 0.0
        %v1951 = vmul.f32 %v1947, 0.1
        %v1952 = vmul.f32 %v1948, 0.1
        %v1953 = vsel %vm1949, %v1947, %v1951
        %v1954 = vsel %vm1950, %v1948, %v1952
        %v1956 = vsel %vm504, %v1954, 0
        %1958 = vmatprep.subr.mxu0 0.0
        %1959 = vmatpush1.msra.mxu0 %v1953
        %1960 = vmatprep.subr.mxu0 0.0
        %1961 = vmatpush1.msra.mxu0 %v1956
        %1962 = vmatprep.subr.mxu0 0.0
        %1963 = vmatpush1.msra.mxu0 0.0
        %1964 = vmatprep.subr.mxu0 0.0
        %1965 = vmatpush1.msra.mxu0 0.0
        %1966 = vmatprep.subr.mxu0 0.0
        %1967 = vmatpush1.msra.mxu0 0.0
        %1968 = vmatprep.subr.mxu0 0.0
        %1969 = vmatpush1.msra.mxu0 0.0
        %1970 = vmatprep.subr.mxu0 0.0
        %1971 = vmatpush1.msra.mxu0 0.0
        %1972 = vmatprep.subr.mxu0 0.0
        %1973 = vmatpush1.msra.mxu0 0.0
        %1974 = vmatprep.subr.mxu0 0.0
        %1975 = vmatpush1.msra.mxu0 0.0
        %1976 = vmatprep.subr.mxu0 0.0
        %1977 = vmatpush1.msra.mxu0 0.0
        %1978 = vmatprep.subr.mxu0 0.0
        %1979 = vmatpush1.msra.mxu0 0.0
        %1980 = vmatprep.subr.mxu0 0.0
        %1981 = vmatpush1.msra.mxu0 0.0
        %1982 = vmatprep.subr.mxu0 0.0
        %1983 = vmatpush1.msra.mxu0 0.0
        %1984 = vmatprep.subr.mxu0 0.0
        %1985 = vmatpush1.msra.mxu0 0.0
        %1986 = vmatprep.subr.mxu0 0.0
        %1987 = vmatpush1.msra.mxu0 0.0
        %1988 = vmatprep.subr.mxu0 0.0
        %1989 = vmatpush1.msra.mxu0 0.0
        %1990 = vmatprep.subr.mxu0 0.0
        %1991 = vmatpush1.msra.mxu0 0.0
        %1992 = vmatprep.subr.mxu0 0.0
        %1993 = vmatpush1.msra.mxu0 0.0
        %1994 = vmatprep.subr.mxu0 0.0
        %1995 = vmatpush1.msra.mxu0 0.0
        %1996 = vmatprep.subr.mxu0 0.0
        %1997 = vmatpush1.msra.mxu0 0.0
        %1998 = vmatprep.subr.mxu0 0.0
        %1999 = vmatpush1.msra.mxu0 0.0
        %2000 = vmatprep.subr.mxu0 0.0
        %2001 = vmatpush1.msra.mxu0 0.0
        %2002 = vmatprep.subr.mxu0 0.0
        %2003 = vmatpush1.msra.mxu0 0.0
        %2004 = vmatprep.subr.mxu0 0.0
        %2005 = vmatpush1.msra.mxu0 0.0
        %2006 = vmatprep.subr.mxu0 0.0
        %2007 = vmatpush1.msra.mxu0 0.0
        %2008 = vmatprep.subr.mxu0 0.0
        %2009 = vmatpush1.msra.mxu0 0.0
        %2010 = vmatprep.subr.mxu0 0.0
        %2011 = vmatpush1.msra.mxu0 0.0
        %2012 = vmatprep.subr.mxu0 0.0
        %2013 = vmatpush1.msra.mxu0 0.0
        %2014 = vmatprep.subr.mxu0 0.0
        %2015 = vmatpush1.msra.mxu0 0.0
        %2016 = vmatprep.subr.mxu0 0.0
        %2017 = vmatpush1.msra.mxu0 0.0
        %2018 = vmatprep.subr.mxu0 0.0
        %2019 = vmatpush1.msra.mxu0 0.0
        %2020 = vmatprep.subr.mxu0 0.0
        %2021 = vmatpush1.msra.mxu0 0.0
        %2022 = vmatprep.mubr.f32.mxu0 0.0
        %2023 = vmatmul.mubr.f32.gmra.mrb[0].mxu0 %v499
        %v2024 = vpop.f32.mrb[0].mxu0
        %v2025 = vadd.f32 0.0, %v2024
        %v2026 = vpop.f32.mrb[0].mxu0
        %2027 = vmatprep.mubr.f32.mxu0 0.0
        %2028 = vmatmul.mubr.f32.gmra.mrb[0].mxu0 %v502
        %v2029 = vpop.f32.mrb[0].mxu0
        %v2030 = vadd.f32 0.0, %v2029
        %v2031 = vpop.f32.mrb[0].mxu0
        %2032 = vdwg.mxu0
        %v2034 = vsel %vm583, %v2025, 0
        %v2037 = vsel %vm583, %v2030, 0
        %2039 = vmatprep.subr.mxu0 0.0
        %2040 = vmatpush1.msra.mxu0 %v413
        %2041 = vmatprep.subr.mxu0 0.0
        %2042 = vmatpush1.msra.mxu0 %v414
        %2043 = vmatprep.subr.mxu0 0.0
        %2044 = vmatpush1.msra.mxu0 0.0
        %2045 = vmatprep.subr.mxu0 0.0
        %2046 = vmatpush1.msra.mxu0 0.0
        %2047 = vmatprep.subr.mxu0 0.0
        %2048 = vmatpush1.msra.mxu0 0.0
        %2049 = vmatprep.subr.mxu0 0.0
        %2050 = vmatpush1.msra.mxu0 0.0
        %2051 = vmatprep.subr.mxu0 0.0
        %2052 = vmatpush1.msra.mxu0 0.0
        %2053 = vmatprep.subr.mxu0 0.0
        %2054 = vmatpush1.msra.mxu0 0.0
        %2055 = vmatprep.subr.mxu0 0.0
        %2056 = vmatpush1.msra.mxu0 0.0
        %2057 = vmatprep.subr.mxu0 0.0
        %2058 = vmatpush1.msra.mxu0 0.0
        %2059 = vmatprep.subr.mxu0 0.0
        %2060 = vmatpush1.msra.mxu0 0.0
        %2061 = vmatprep.subr.mxu0 0.0
        %2062 = vmatpush1.msra.mxu0 0.0
        %2063 = vmatprep.subr.mxu0 0.0
        %2064 = vmatpush1.msra.mxu0 0.0
        %2065 = vmatprep.subr.mxu0 0.0
        %2066 = vmatpush1.msra.mxu0 0.0
        %2067 = vmatprep.subr.mxu0 0.0
        %2068 = vmatpush1.msra.mxu0 0.0
        %2069 = vmatprep.subr.mxu0 0.0
        %2070 = vmatpush1.msra.mxu0 0.0
        %2071 = vmatprep.subr.mxu0 0.0
        %2072 = vmatpush1.msra.mxu0 0.0
        %2073 = vmatprep.subr.mxu0 0.0
        %2074 = vmatpush1.msra.mxu0 0.0
        %2075 = vmatprep.subr.mxu0 0.0
        %2076 = vmatpush1.msra.mxu0 0.0
        %2077 = vmatprep.subr.mxu0 0.0
        %2078 = vmatpush1.msra.mxu0 0.0
        %2079 = vmatprep.subr.mxu0 0.0
        %2080 = vmatpush1.msra.mxu0 0.0
        %2081 = vmatprep.subr.mxu0 0.0
        %2082 = vmatpush1.msra.mxu0 0.0
        %2083 = vmatprep.subr.mxu0 0.0
        %2084 = vmatpush1.msra.mxu0 0.0
        %2085 = vmatprep.subr.mxu0 0.0
        %2086 = vmatpush1.msra.mxu0 0.0
        %2087 = vmatprep.subr.mxu0 0.0
        %2088 = vmatpush1.msra.mxu0 0.0
        %2089 = vmatprep.subr.mxu0 0.0
        %2090 = vmatpush1.msra.mxu0 0.0
        %2091 = vmatprep.subr.mxu0 0.0
        %2092 = vmatpush1.msra.mxu0 0.0
        %2093 = vmatprep.subr.mxu0 0.0
        %2094 = vmatpush1.msra.mxu0 0.0
        %2095 = vmatprep.subr.mxu0 0.0
        %2096 = vmatpush1.msra.mxu0 0.0
        %2097 = vmatprep.subr.mxu0 0.0
        %2098 = vmatpush1.msra.mxu0 0.0
        %2099 = vmatprep.subr.mxu0 0.0
        %2100 = vmatpush1.msra.mxu0 0.0
        %2101 = vmatprep.subr.mxu0 0.0
        %2102 = vmatpush1.msra.mxu0 0.0
        %2103 = vmatprep.mubr.f32.mxu0 0.0
        %2104 = vmatmul.mubr.f32.gmra.mrb[0].mxu0 %v2034
        %v2105 = vpop.f32.mrb[0].mxu0
        %v2106 = vadd.f32 0.0, %v2105
        %v2107 = vpop.f32.mrb[0].mxu0
        %2108 = vmatprep.mubr.f32.mxu0 0.0
        %2109 = vmatmul.mubr.f32.gmra.mrb[0].mxu0 %v2037
        %v2110 = vpop.f32.mrb[0].mxu0
        %v2111 = vadd.f32 0.0, %v2110
        %v2112 = vpop.f32.mrb[0].mxu0
        %2113 = vdwg.mxu0
        %s2114 = scalar_lea.vmem %s387, 112 [#allocation3]
        %2115 = vst.msk [vmem:[%s2114] sm:$0xff] %vm665, %v2106
        %2116 = vst.msk [vmem:[%s2114 + $0x8] sm:$0xff] %vm665, %v2111
        %s2117 = sand.u32 %s212, 1
        %s2118 = scalar_lea.sflag [#allocation4], %s2117
        %s2119 = sand.u32 %s212, 1
        %s2120 = smul.addr %s2119, 128
        %s2121 = scalar_lea.vmem [#allocation3], %s2120
        // Predicated region
        $region87: #{tpu_custom_call.1} parent=81 // pred_check
          %p2122 = pneg %p222
        $region88: #{tpu_custom_call.1} parent=81 // pred_check_branch
          %2124 = sbr.rel (%p2122) target = $region90
        $region89: #{tpu_custom_call.1} parent=81 // pred_region
          #allocation6 [shape = 'u32[6]{0}', space=smem, size = 0x18, scoped, tag = 'DMA stride descriptor']
          %s2125 = smul.u32 2, %s27
          %s2127 = ssub.s32 2048, 2048
          %2128 = vsyncadd %s2118, %s2127
          %s2129 = smul.addr %s26, 44
          %s2130 = sadd.s32 %s2125, %s2129
          %s2131 = smul.addr %s2130, 128
          %s2132 = scalar_lea.hbm %s8, %s2131
          %s2134 = sshll.u32 1, 14
          %s2135 = sxor.u32 4294967295, %s2134
          %s2138 = sshll.u32 7, 18
          %s2139 = sxor.u32 4294967295, %s2138
          %s2140 = sand.u32 0, %s2139
          %s2142 = sor.u32 %s2140, 0
          %s2144 = sshll.u32 3, 24
          %s2145 = sxor.u32 4294967295, %s2144
          %s2146 = sand.u32 %s2142, %s2145
          %s2148 = sor.u32 %s2146, 0
          %s2149 = sshll.u32 %s2121, 4
          %s2150 = int_to_ptr.vmem [resolvable:$true] %s2149
          %2156 = sst [smem:[#allocation6]] 256
          %s2157 = scalar_lea.smem [#allocation6], 1
          %2158 = sst [smem:[%s2157]] 512
          %s2159 = scalar_lea.smem [#allocation6], 2
          %2160 = sst [smem:[%s2159]] 2
          %s2161 = scalar_lea.smem [#allocation6], 3
          %2162 = sst [smem:[%s2161]] 128
          %s2163 = scalar_lea.smem [#allocation6], 4
          %2164 = sst [smem:[%s2163]] 128
          %s2165 = scalar_lea.smem [#allocation6], 5
          %2166 = sst [smem:[%s2165]] 8
          %2168 = dma.general %s2150, 2048, %s2132, %s2118, [#allocation5], [#allocation6], %s2148, 0
        $region90: #{tpu_custom_call.1} parent=81 // pred_fallthru
          _
      $region82: #{tpu_custom_call.1} parent=5 // pred_fallthru
        _
      %p2169 = scmp.le.s32.totalorder 2, %s17
      // Predicated region
      $region91: #{tpu_custom_call.1} parent=5 // pred_check
        %p2170 = pneg %p2169
      $region92: #{tpu_custom_call.1} parent=5 // pred_check_branch
        %2172 = sbr.rel (%p2170) target = $region94
      $region93: #{tpu_custom_call.1} parent=5 // pred_region
        %s2173 = ssub.s32 %s17, 2
        // Predicated region
        $region95: #{tpu_custom_call.1} parent=93 // pred_check
          %p2174 = pneg %p228
        $region96: #{tpu_custom_call.1} parent=93 // pred_check_branch
          %2176 = sbr.rel (%p2174) target = $region98
        $region97: #{tpu_custom_call.1} parent=93 // pred_region
          %s2177 = sand.u32 %s213, 1
          %s2178 = scalar_lea.sflag [#allocation4], %s2177
          %s2179 = sand.u32 %s213, 1
          %s2180 = smul.addr %s2179, 128
          %s2181 = scalar_lea.vmem [#allocation3], %s2180
          %2182 = dma.done %s2178, 2048
        $region98: #{tpu_custom_call.1} parent=93 // pred_fallthru
          _
      $region94: #{tpu_custom_call.1} parent=5 // pred_fallthru
        _
    $region6: #{tpu_custom_call.1} parent=1 // loop_footer
      %s21 = sadd.s32 1, %s17
    $region7: #{tpu_custom_call.1} parent=1 // loop_footer_branch
      %16 = sbr.rel target = $region3
    $region8: #{tpu_custom_call.1} parent=1 // loop_exit
      _
    %2183 = vsyncpa [#allocation4], 1
    %s2184 = scalar_lea.sflag [#allocation4], 1
    %2185 = vsyncpa %s2184, 1

</llo_original>
